<compile_context>
chip_gen: v6e
topology: v6e:2x2x1
jax: 0.10.0
libtpu: 0.0.40
codegen_flags: <defaults>
</compile_context>

<pallas_src>
import jax
import jax.numpy as jnp
from jax import lax
from jax.experimental import pallas as pl
from jax.experimental.pallas import tpu as pltpu


def _mlp_kernel(x_ref, w1_ref, b1_ref, w2_ref, b2_ref, w3_ref, b3_ref,
                w4_ref, b4_ref, o_ref):
    # fc1 + relu: (tb, D) @ (D, 128)
    h = jnp.dot(x_ref[...], w1_ref[...], preferred_element_type=jnp.float32)
    h = jnp.maximum(h + b1_ref[...], 0.0)
    # fc2 + relu: (tb, 128) @ (128, 64)
    h = jnp.dot(h, w2_ref[...], preferred_element_type=jnp.float32)
    h = jnp.maximum(h + b2_ref[...], 0.0)
    # fc3 + relu: (tb, 64) @ (64, 32)
    h = jnp.dot(h, w3_ref[...], preferred_element_type=jnp.float32)
    h = jnp.maximum(h + b3_ref[...], 0.0)
    # fc4: (1, 32) · (tb, 32)ᵀ -> (1, tb) (rhs-contracted dot, same pattern as
    # q @ k.T) so the result is already a lane-dense row -> wide unmasked stores.
    z = lax.dot_general(w4_ref[...], h, (((1,), (1,)), ((), ())),
                        preferred_element_type=jnp.float32)
    z = z + b4_ref[...]                       # (1, 1) broadcasts across lanes
    # sigmoid: exp on the EUP, reciprocal instead of a VPU divide.
    o_ref[...] = pl.reciprocal(1.0 + jnp.exp(-z))


def modelo_nn_forward(x, params, *, tb=512):
    """Pallas implementation of ModeloNN.forward.

    x: (B, D) float32
    params: w1 (D,128), w2 (128,64), w3 (64,32) stored (in, out);
            w4 (1,32) stored (out, in); b1..b3 (1, out); b4 (1, 1).
    returns: (B, 1) float32
    """
    B, D = x.shape
    w1, b1 = params["w1"], params["b1"]
    w2, b2 = params["w2"], params["b2"]
    w3, b3 = params["w3"], params["b3"]
    w4, b4 = params["w4"], params["b4"]

    # Batch tile: large (amortize ~0.35us/step grid overhead), multiple of 256,
    # but no larger than the (padded) batch. VMEM footprint is <1 MiB at any tb
    # here (weights total ~42 KiB), so tile size is not VMEM-limited.
    tb = max(256, min(int(tb), pl.cdiv(B, 256) * 256))
    tb = (tb // 256) * 256
    n_tiles = pl.cdiv(B, tb)
    b_pad = n_tiles * tb
    if b_pad != B:  # pad the ragged last tile instead of asserting divisibility
        x = jnp.pad(x, ((0, b_pad - B), (0, 0)))

    full = lambda arr: pl.BlockSpec(arr.shape, lambda i: (0, 0))

    flops = 2 * b_pad * (D * 128 + 128 * 64 + 64 * 32 + 32 * 1)
    bytes_accessed = 4 * (x.size + w1.size + b1.size + w2.size + b2.size
                          + w3.size + b3.size + w4.size + b4.size + b_pad)

    out_row = pl.pallas_call(
        _mlp_kernel,
        out_shape=jax.ShapeDtypeStruct((1, b_pad), jnp.float32),
        grid=(n_tiles,),
        in_specs=[
            pl.BlockSpec((tb, D), lambda i: (i, 0)),   # x batch tile
            full(w1), full(b1),
            full(w2), full(b2),
            full(w3), full(b3),
            full(w4), full(b4),
        ],
        out_specs=pl.BlockSpec((1, tb), lambda i: (0, i)),  # lane-dense output slab
        compiler_params=pltpu.CompilerParams(
            dimension_semantics=("parallel",)),             # megacore / 2-TC sharding
        cost_estimate=pl.CostEstimate(
            flops=flops, transcendentals=b_pad, bytes_accessed=bytes_accessed),
    )(x, w1, b1, w2, b2, w3, b3, w4, b4)

    # (1, B_pad) row -> (B, 1) column, dropping padded rows.
    return out_row.reshape(b_pad, 1)[:B]


def init_params(input_dim, key):
    """Deterministic init mirroring ModeloNN's nn.Linear shapes.
    PyTorch weights are (out, in); we store (in, out) for fc1..fc3 and keep the
    PyTorch (out, in) layout for fc4 (used as the transposed operand in-kernel)."""
    dims = [(input_dim, 128), (128, 64), (64, 32), (32, 1)]
    params = {}
    for idx, (din, dout) in enumerate(dims, start=1):
        key, kw, kb = jax.random.split(key, 3)
        bound = 1.0 / (din ** 0.5)  # matches nn.Linear default U(-1/sqrt(in), 1/sqrt(in))
        wshape = (din, dout) if idx < 4 else (dout, din)
        params[f"w{idx}"] = jax.random.uniform(
            kw, wshape, jnp.float32, minval=-bound, maxval=bound)
        params[f"b{idx}"] = jax.random.uniform(
            kb, (1, dout), jnp.float32, minval=-bound, maxval=bound)
    return params


def reference_forward(x, params):
    h = jnp.maximum(x @ params["w1"] + params["b1"], 0.0)
    h = jnp.maximum(h @ params["w2"] + params["b2"], 0.0)
    h = jnp.maximum(h @ params["w3"] + params["b3"], 0.0)
    return jax.nn.sigmoid(h @ params["w4"].T + params["b4"])


if __name__ == "__main__":
    key = jax.random.PRNGKey(0)
    key, kx, kp = jax.random.split(key, 3)

    # Small-but-realistic shapes: non-multiple batch exercises the padded last
    # tile, and with tb=512 the grid has 2 parallel steps (both v7x TCs busy).
    batch, input_dim = 1000, 16
    x = jax.random.normal(kx, (batch, input_dim), jnp.float32)
    params = init_params(input_dim, kp)

    out = jax.block_until_ready(modelo_nn_forward(x, params))

    ref = reference_forward(x, params)
    assert out.shape == (batch, 1)
    assert jnp.allclose(out, ref, atol=1e-5, rtol=1e-5)
    print("KERNEL_OK")
</pallas_src>

<mosaic_0001>
module attributes {stable_mosaic.version = 11 : i64} {
  func.func @_mlp_kernel(%arg0: i32, %arg1: memref<512x16xf32, #tpu.memory_space<vmem>>, %arg2: memref<16x128xf32, #tpu.memory_space<vmem>>, %arg3: memref<1x128xf32, #tpu.memory_space<vmem>>, %arg4: memref<128x64xf32, #tpu.memory_space<vmem>>, %arg5: memref<1x64xf32, #tpu.memory_space<vmem>>, %arg6: memref<64x32xf32, #tpu.memory_space<vmem>>, %arg7: memref<1x32xf32, #tpu.memory_space<vmem>>, %arg8: memref<1x32xf32, #tpu.memory_space<vmem>>, %arg9: memref<1x1xf32, #tpu.memory_space<vmem>>, %arg10: memref<1x512xf32, #tpu.memory_space<vmem>>) attributes {dimension_semantics = [#tpu.dimension_semantics<parallel>], iteration_bounds = array<i64: 2>, scalar_prefetch = 0 : i64, scratch_operands = 0 : i64, tpu.core_type = #tpu.core_type<tc>, window_params = [{transform_indices = @transform_0, window_bounds = array<i64: 512, 16>}, {pipeline_mode = #tpu.pipeline_mode<synchronous>, transform_indices = @transform_1, window_bounds = array<i64: 16, 128>}, {pipeline_mode = #tpu.pipeline_mode<synchronous>, transform_indices = @transform_2, window_bounds = array<i64: 1, 128>}, {pipeline_mode = #tpu.pipeline_mode<synchronous>, transform_indices = @transform_3, window_bounds = array<i64: 128, 64>}, {pipeline_mode = #tpu.pipeline_mode<synchronous>, transform_indices = @transform_4, window_bounds = array<i64: 1, 64>}, {pipeline_mode = #tpu.pipeline_mode<synchronous>, transform_indices = @transform_5, window_bounds = array<i64: 64, 32>}, {pipeline_mode = #tpu.pipeline_mode<synchronous>, transform_indices = @transform_6, window_bounds = array<i64: 1, 32>}, {pipeline_mode = #tpu.pipeline_mode<synchronous>, transform_indices = @transform_7, window_bounds = array<i64: 1, 32>}, {pipeline_mode = #tpu.pipeline_mode<synchronous>, transform_indices = @transform_8, window_bounds = array<i64: 1, 1>}, {transform_indices = @transform_9, window_bounds = array<i64: 1, 512>}]} {
    %c0 = arith.constant 0 : index
    %c0_0 = arith.constant 0 : index
    %0 = vector.load %arg1[%c0, %c0_0] : memref<512x16xf32, #tpu.memory_space<vmem>>, vector<512x16xf32>
    %c0_1 = arith.constant 0 : index
    %c0_2 = arith.constant 0 : index
    %1 = vector.load %arg2[%c0_1, %c0_2] : memref<16x128xf32, #tpu.memory_space<vmem>>, vector<16x128xf32>
    %cst = arith.constant dense<0.000000e+00> : vector<512x128xf32>
    %2 = tpu.matmul %0, %1, %cst {dimension_numbers = #tpu.dot_dimension_numbers<[1], [0], [0], [1], [0, 0, 1, 1], [], []>} : vector<512x16xf32>, vector<16x128xf32>, vector<512x128xf32> -> vector<512x128xf32>
    %c0_3 = arith.constant 0 : index
    %c0_4 = arith.constant 0 : index
    %3 = vector.load %arg3[%c0_3, %c0_4] : memref<1x128xf32, #tpu.memory_space<vmem>>, vector<1x128xf32>
    %4 = vector.broadcast %3 : vector<1x128xf32> to vector<512x128xf32>
    %5 = arith.addf %2, %4 : vector<512x128xf32>
    %cst_5 = arith.constant 0.000000e+00 : f32
    %6 = vector.broadcast %cst_5 : f32 to vector<512x128xf32>
    %7 = arith.maximumf %5, %6 : vector<512x128xf32>
    %c0_6 = arith.constant 0 : index
    %c0_7 = arith.constant 0 : index
    %8 = vector.load %arg4[%c0_6, %c0_7] : memref<128x64xf32, #tpu.memory_space<vmem>>, vector<128x64xf32>
    %cst_8 = arith.constant dense<0.000000e+00> : vector<512x64xf32>
    %9 = tpu.matmul %7, %8, %cst_8 {dimension_numbers = #tpu.dot_dimension_numbers<[1], [0], [0], [1], [0, 0, 1, 1], [], []>} : vector<512x128xf32>, vector<128x64xf32>, vector<512x64xf32> -> vector<512x64xf32>
    %c0_9 = arith.constant 0 : index
    %c0_10 = arith.constant 0 : index
    %10 = vector.load %arg5[%c0_9, %c0_10] : memref<1x64xf32, #tpu.memory_space<vmem>>, vector<1x64xf32>
    %11 = vector.broadcast %10 : vector<1x64xf32> to vector<512x64xf32>
    %12 = arith.addf %9, %11 : vector<512x64xf32>
    %cst_11 = arith.constant 0.000000e+00 : f32
    %13 = vector.broadcast %cst_11 : f32 to vector<512x64xf32>
    %14 = arith.maximumf %12, %13 : vector<512x64xf32>
    %c0_12 = arith.constant 0 : index
    %c0_13 = arith.constant 0 : index
    %15 = vector.load %arg6[%c0_12, %c0_13] : memref<64x32xf32, #tpu.memory_space<vmem>>, vector<64x32xf32>
    %cst_14 = arith.constant dense<0.000000e+00> : vector<512x32xf32>
    %16 = tpu.matmul %14, %15, %cst_14 {dimension_numbers = #tpu.dot_dimension_numbers<[1], [0], [0], [1], [0, 0, 1, 1], [], []>} : vector<512x64xf32>, vector<64x32xf32>, vector<512x32xf32> -> vector<512x32xf32>
    %c0_15 = arith.constant 0 : index
    %c0_16 = arith.constant 0 : index
    %17 = vector.load %arg7[%c0_15, %c0_16] : memref<1x32xf32, #tpu.memory_space<vmem>>, vector<1x32xf32>
    %18 = vector.broadcast %17 : vector<1x32xf32> to vector<512x32xf32>
    %19 = arith.addf %16, %18 : vector<512x32xf32>
    %cst_17 = arith.constant 0.000000e+00 : f32
    %20 = vector.broadcast %cst_17 : f32 to vector<512x32xf32>
    %21 = arith.maximumf %19, %20 : vector<512x32xf32>
    %c0_18 = arith.constant 0 : index
    %c0_19 = arith.constant 0 : index
    %22 = vector.load %arg8[%c0_18, %c0_19] : memref<1x32xf32, #tpu.memory_space<vmem>>, vector<1x32xf32>
    %cst_20 = arith.constant dense<0.000000e+00> : vector<1x512xf32>
    %23 = tpu.matmul %22, %21, %cst_20 {dimension_numbers = #tpu.dot_dimension_numbers<[1], [1], [0], [0], [0, 0, 1, 0], [], []>} : vector<1x32xf32>, vector<512x32xf32>, vector<1x512xf32> -> vector<1x512xf32>
    %c0_21 = arith.constant 0 : index
    %c0_22 = arith.constant 0 : index
    %24 = vector.load %arg9[%c0_21, %c0_22] : memref<1x1xf32, #tpu.memory_space<vmem>>, vector<1x1xf32>
    %25 = vector.broadcast %24 : vector<1x1xf32> to vector<1x512xf32>
    %26 = arith.addf %23, %25 : vector<1x512xf32>
    %cst_23 = arith.constant 0.000000e+00 : f32
    %27 = vector.broadcast %cst_23 : f32 to vector<1x512xf32>
    %28 = arith.subf %27, %26 : vector<1x512xf32>
    %29 = math.exp %28 : vector<1x512xf32>
    %cst_24 = arith.constant 1.000000e+00 : f32
    %30 = vector.broadcast %cst_24 : f32 to vector<1x512xf32>
    %31 = arith.addf %30, %29 : vector<1x512xf32>
    %32 = tpu.reciprocal %31 : vector<1x512xf32> -> vector<1x512xf32>
    %c0_25 = arith.constant 0 : index
    %c0_26 = arith.constant 0 : index
    %33 = vector.load %arg10[%c0_25, %c0_26] : memref<1x512xf32, #tpu.memory_space<vmem>>, vector<1x512xf32>
    tpu.vector_store %arg10[%c0_25, %c0_26], %32 {strides = array<i32>} : memref<1x512xf32, #tpu.memory_space<vmem>>, vector<1x512xf32>,
    return
  }
  func.func @transform_0(%arg0: i32) -> (i32, i32) {
    %c0_i32 = arith.constant 0 : i32
    %c0_i32_0 = arith.constant 0 : i32
    return %arg0, %c0_i32 : i32, i32
  }
  func.func @transform_1(%arg0: i32) -> (i32, i32) {
    %c0_i32 = arith.constant 0 : i32
    %c0_i32_0 = arith.constant 0 : i32
    %c0_i32_1 = arith.constant 0 : i32
    return %c0_i32, %c0_i32_0 : i32, i32
  }
  func.func @transform_2(%arg0: i32) -> (i32, i32) {
    %c0_i32 = arith.constant 0 : i32
    %c0_i32_0 = arith.constant 0 : i32
    %c0_i32_1 = arith.constant 0 : i32
    return %c0_i32, %c0_i32_0 : i32, i32
  }
  func.func @transform_3(%arg0: i32) -> (i32, i32) {
    %c0_i32 = arith.constant 0 : i32
    %c0_i32_0 = arith.constant 0 : i32
    %c0_i32_1 = arith.constant 0 : i32
    return %c0_i32, %c0_i32_0 : i32, i32
  }
  func.func @transform_4(%arg0: i32) -> (i32, i32) {
    %c0_i32 = arith.constant 0 : i32
    %c0_i32_0 = arith.constant 0 : i32
    %c0_i32_1 = arith.constant 0 : i32
    return %c0_i32, %c0_i32_0 : i32, i32
  }
  func.func @transform_5(%arg0: i32) -> (i32, i32) {
    %c0_i32 = arith.constant 0 : i32
    %c0_i32_0 = arith.constant 0 : i32
    %c0_i32_1 = arith.constant 0 : i32
    return %c0_i32, %c0_i32_0 : i32, i32
  }
  func.func @transform_6(%arg0: i32) -> (i32, i32) {
    %c0_i32 = arith.constant 0 : i32
    %c0_i32_0 = arith.constant 0 : i32
    %c0_i32_1 = arith.constant 0 : i32
    return %c0_i32, %c0_i32_0 : i32, i32
  }
  func.func @transform_7(%arg0: i32) -> (i32, i32) {
    %c0_i32 = arith.constant 0 : i32
    %c0_i32_0 = arith.constant 0 : i32
    %c0_i32_1 = arith.constant 0 : i32
    return %c0_i32, %c0_i32_0 : i32, i32
  }
  func.func @transform_8(%arg0: i32) -> (i32, i32) {
    %c0_i32 = arith.constant 0 : i32
    %c0_i32_0 = arith.constant 0 : i32
    %c0_i32_1 = arith.constant 0 : i32
    return %c0_i32, %c0_i32_0 : i32, i32
  }
  func.func @transform_9(%arg0: i32) -> (i32, i32) {
    %c0_i32 = arith.constant 0 : i32
    %c0_i32_0 = arith.constant 0 : i32
    return %c0_i32, %arg0 : i32, i32
  }
}

</mosaic_0001>

<llo_original>
// kernel: tpu_custom_call.1
$region0: #{tpu_custom_call.1}
  #allocation0 [shape = 'u32[]', space=smem, size = 0x4, offset = 0x4, fixed_abs, tag = 'smem constant byte address 0x4 - core index']
  #allocation1 [shape = 'u32[144,128]{1,0:T(1,128)}', space=vmem, size = 0x12000, scoped, tag = 'internal scratch']
  #allocation2 [shape = 'f32[1,1]{1,0:T(1,128)S(1)}', space=vmem, size = 0x200, scoped, tag = 'scoped memory for tpu_custom_call.1']
  %s0 = inlined_call_operand.vmem [shape: f32[1024,16], index: 0, kind: input, shape index: {}]
  %s1 = inlined_call_operand.vmem [shape: f32[16,128], index: 1, kind: input, shape index: {}]
  %s2 = inlined_call_operand.vmem [shape: f32[1,128], index: 2, kind: input, shape index: {}]
  %s3 = inlined_call_operand.vmem [shape: f32[128,64], index: 3, kind: input, shape index: {}]
  %s4 = inlined_call_operand.vmem [shape: f32[1,64], index: 4, kind: input, shape index: {}]
  %s5 = inlined_call_operand.vmem [shape: f32[64,32], index: 5, kind: input, shape index: {}]
  %s6 = inlined_call_operand.vmem [shape: f32[1,32], index: 6, kind: input, shape index: {}]
  %s7 = inlined_call_operand.vmem [shape: f32[1,32], index: 7, kind: input, shape index: {}]
  %s8 = inlined_call_operand.<no memory space> [shape: f32[1,1], index: 8, kind: input, shape index: {}]
  %s9 = inlined_call_operand.hbm [shape: f32[1,1024], index: 9, kind: output, shape index: {}]
  %s10 = sld [smem:[#allocation0]]
  $region69: #{tpu_custom_call.1} parent=0
    _
  %s12 = ssub.s32 1, %s10
  %s13 = scalar_select 0, %s12, %s10
  %v14 = vstv %s8
  %15 = vst [vmem:[#allocation2] sm:$0x1] %v14
  $region1: #{tpu_custom_call.1} parent=0
    #allocation3 [shape = 'u8[4096]{0}', space=vmem, size = 0x1000, scoped, tag = 'output window, operand 0']
    #allocation4 [shape = 's32[2]{0}', space=sflag, size = 0x8, scoped, tag = 'scoped memory for tpu_custom_call.1']
    %16 = vsyncpa [#allocation4], 0
    %s17 = scalar_lea.sflag [#allocation4], 1
    %18 = vsyncpa %s17, 0
    loop: start=0, step=1, limit=4
    $region2: #{tpu_custom_call.1} parent=1 // loop_pre_header
      _
    $region3: #{tpu_custom_call.1} parent=1 // loop_header
      %s20 = sphi 0, %s24
      %p21 = scmp.ge.s32.totalorder %s20, 4
      %s30 = sphi 0, %s32
      %s33 = sphi 0, %s30
      %s34 = sphi 0, %s33
      %s50 = sphi 0, %s34
      %s54 = sphi 0, %s54
      %s56 = sphi 0, %s54
      %s57 = sphi 0, %s56
      %s71 = sphi 0, %s57
      %s75 = sphi 0, %s75
      %s77 = sphi 0, %s75
      %s78 = sphi 0, %s77
      %s92 = sphi 0, %s78
      %s96 = sphi 0, %s96
      %s98 = sphi 0, %s96
      %s99 = sphi 0, %s98
      %s113 = sphi 0, %s99
      %s117 = sphi 0, %s117
      %s119 = sphi 0, %s117
      %s120 = sphi 0, %s119
      %s134 = sphi 0, %s120
      %s138 = sphi 0, %s138
      %s140 = sphi 0, %s138
      %s141 = sphi 0, %s140
      %s155 = sphi 0, %s141
      %s159 = sphi 0, %s159
      %s161 = sphi 0, %s159
      %s162 = sphi 0, %s161
      %s176 = sphi 0, %s162
      %s180 = sphi 0, %s180
      %s182 = sphi 0, %s180
      %s183 = sphi 0, %s182
      %s197 = sphi 0, %s183
      %s201 = sphi 0, %s201
      %s203 = sphi 0, %s201
      %s204 = sphi 0, %s203
      %s218 = sphi 0, %s204
      %s224 = sphi 0, %s226
      %s227 = sphi 0, %s224
      %s228 = sphi 0, %s227
      %s244 = sphi 0, %s228
    $region4: #{tpu_custom_call.1} parent=1 // loop_header_branch
      %23 = sbr.rel (%p21) target = $region8
    $region5: #{tpu_custom_call.1} parent=1 // loop_body
      %s25 = ssub.s32 %s20, 1
      %s26 = ssub.s32 %s20, 2
      %s27 = sadd.s32 %s20, 1
      %s28 = ssub.s32 %s20, %s27
      %p29 = scmp.eq.s32.totalorder %s28, 0
      %s31 = sadd.s32 %s30, 1
      %s32 = scalar_select %p29, %s30, %s31
      %p35 = pneg %p29
      %p36 = scmp.eq.s32.totalorder %s20, 1
      %p37 = por %p35, %p36
      %p38 = scmp.ne.s32.totalorder %s30, %s33
      %p39 = scmp.eq.s32.totalorder %s20, 0
      %p40 = por %p38, %p39
      %p41 = scmp.ne.s32.totalorder %s30, %s33
      %p42 = scmp.eq.s32.totalorder %s25, 1
      %p43 = por %p41, %p42
      %p44 = scmp.ne.s32.totalorder %s33, %s34
      %p45 = scmp.eq.s32.totalorder %s25, 0
      %p46 = por %p44, %p45
      %p47 = scmp.ne.s32.totalorder %s33, %s34
      %p48 = scmp.eq.s32.totalorder %s26, 1
      %p49 = por %p47, %p48
      %p51 = scmp.ne.s32.totalorder %s34, %s50
      %p52 = scmp.eq.s32.totalorder %s26, 0
      %p53 = por %p51, %p52
      %s55 = sadd.s32 %s54, 1
      %p58 = scmp.eq.s32.totalorder %s20, 1
      %p59 = scmp.ne.s32.totalorder %s54, %s56
      %p60 = scmp.eq.s32.totalorder %s20, 0
      %p61 = por %p59, %p60
      %p62 = scmp.ne.s32.totalorder %s54, %s56
      %p63 = scmp.eq.s32.totalorder %s25, 1
      %p64 = por %p62, %p63
      %p65 = scmp.ne.s32.totalorder %s56, %s57
      %p66 = scmp.eq.s32.totalorder %s25, 0
      %p67 = por %p65, %p66
      %p68 = scmp.ne.s32.totalorder %s56, %s57
      %p69 = scmp.eq.s32.totalorder %s26, 1
      %p70 = por %p68, %p69
      %p72 = scmp.ne.s32.totalorder %s57, %s71
      %p73 = scmp.eq.s32.totalorder %s26, 0
      %p74 = por %p72, %p73
      %s76 = sadd.s32 %s75, 1
      %p79 = scmp.eq.s32.totalorder %s20, 1
      %p80 = scmp.ne.s32.totalorder %s75, %s77
      %p81 = scmp.eq.s32.totalorder %s20, 0
      %p82 = por %p80, %p81
      %p83 = scmp.ne.s32.totalorder %s75, %s77
      %p84 = scmp.eq.s32.totalorder %s25, 1
      %p85 = por %p83, %p84
      %p86 = scmp.ne.s32.totalorder %s77, %s78
      %p87 = scmp.eq.s32.totalorder %s25, 0
      %p88 = por %p86, %p87
      %p89 = scmp.ne.s32.totalorder %s77, %s78
      %p90 = scmp.eq.s32.totalorder %s26, 1
      %p91 = por %p89, %p90
      %p93 = scmp.ne.s32.totalorder %s78, %s92
      %p94 = scmp.eq.s32.totalorder %s26, 0
      %p95 = por %p93, %p94
      %s97 = sadd.s32 %s96, 1
      %p100 = scmp.eq.s32.totalorder %s20, 1
      %p101 = scmp.ne.s32.totalorder %s96, %s98
      %p102 = scmp.eq.s32.totalorder %s20, 0
      %p103 = por %p101, %p102
      %p104 = scmp.ne.s32.totalorder %s96, %s98
      %p105 = scmp.eq.s32.totalorder %s25, 1
      %p106 = por %p104, %p105
      %p107 = scmp.ne.s32.totalorder %s98, %s99
      %p108 = scmp.eq.s32.totalorder %s25, 0
      %p109 = por %p107, %p108
      %p110 = scmp.ne.s32.totalorder %s98, %s99
      %p111 = scmp.eq.s32.totalorder %s26, 1
      %p112 = por %p110, %p111
      %p114 = scmp.ne.s32.totalorder %s99, %s113
      %p115 = scmp.eq.s32.totalorder %s26, 0
      %p116 = por %p114, %p115
      %s118 = sadd.s32 %s117, 1
      %p121 = scmp.eq.s32.totalorder %s20, 1
      %p122 = scmp.ne.s32.totalorder %s117, %s119
      %p123 = scmp.eq.s32.totalorder %s20, 0
      %p124 = por %p122, %p123
      %p125 = scmp.ne.s32.totalorder %s117, %s119
      %p126 = scmp.eq.s32.totalorder %s25, 1
      %p127 = por %p125, %p126
      %p128 = scmp.ne.s32.totalorder %s119, %s120
      %p129 = scmp.eq.s32.totalorder %s25, 0
      %p130 = por %p128, %p129
      %p131 = scmp.ne.s32.totalorder %s119, %s120
      %p132 = scmp.eq.s32.totalorder %s26, 1
      %p133 = por %p131, %p132
      %p135 = scmp.ne.s32.totalorder %s120, %s134
      %p136 = scmp.eq.s32.totalorder %s26, 0
      %p137 = por %p135, %p136
      %s139 = sadd.s32 %s138, 1
      %p142 = scmp.eq.s32.totalorder %s20, 1
      %p143 = scmp.ne.s32.totalorder %s138, %s140
      %p144 = scmp.eq.s32.totalorder %s20, 0
      %p145 = por %p143, %p144
      %p146 = scmp.ne.s32.totalorder %s138, %s140
      %p147 = scmp.eq.s32.totalorder %s25, 1
      %p148 = por %p146, %p147
      %p149 = scmp.ne.s32.totalorder %s140, %s141
      %p150 = scmp.eq.s32.totalorder %s25, 0
      %p151 = por %p149, %p150
      %p152 = scmp.ne.s32.totalorder %s140, %s141
      %p153 = scmp.eq.s32.totalorder %s26, 1
      %p154 = por %p152, %p153
      %p156 = scmp.ne.s32.totalorder %s141, %s155
      %p157 = scmp.eq.s32.totalorder %s26, 0
      %p158 = por %p156, %p157
      %s160 = sadd.s32 %s159, 1
      %p163 = scmp.eq.s32.totalorder %s20, 1
      %p164 = scmp.ne.s32.totalorder %s159, %s161
      %p165 = scmp.eq.s32.totalorder %s20, 0
      %p166 = por %p164, %p165
      %p167 = scmp.ne.s32.totalorder %s159, %s161
      %p168 = scmp.eq.s32.totalorder %s25, 1
      %p169 = por %p167, %p168
      %p170 = scmp.ne.s32.totalorder %s161, %s162
      %p171 = scmp.eq.s32.totalorder %s25, 0
      %p172 = por %p170, %p171
      %p173 = scmp.ne.s32.totalorder %s161, %s162
      %p174 = scmp.eq.s32.totalorder %s26, 1
      %p175 = por %p173, %p174
      %p177 = scmp.ne.s32.totalorder %s162, %s176
      %p178 = scmp.eq.s32.totalorder %s26, 0
      %p179 = por %p177, %p178
      %s181 = sadd.s32 %s180, 1
      %p184 = scmp.eq.s32.totalorder %s20, 1
      %p185 = scmp.ne.s32.totalorder %s180, %s182
      %p186 = scmp.eq.s32.totalorder %s20, 0
      %p187 = por %p185, %p186
      %p188 = scmp.ne.s32.totalorder %s180, %s182
      %p189 = scmp.eq.s32.totalorder %s25, 1
      %p190 = por %p188, %p189
      %p191 = scmp.ne.s32.totalorder %s182, %s183
      %p192 = scmp.eq.s32.totalorder %s25, 0
      %p193 = por %p191, %p192
      %p194 = scmp.ne.s32.totalorder %s182, %s183
      %p195 = scmp.eq.s32.totalorder %s26, 1
      %p196 = por %p194, %p195
      %p198 = scmp.ne.s32.totalorder %s183, %s197
      %p199 = scmp.eq.s32.totalorder %s26, 0
      %p200 = por %p198, %p199
      %s202 = sadd.s32 %s201, 1
      %p205 = scmp.eq.s32.totalorder %s20, 1
      %p206 = scmp.ne.s32.totalorder %s201, %s203
      %p207 = scmp.eq.s32.totalorder %s20, 0
      %p208 = por %p206, %p207
      %p209 = scmp.ne.s32.totalorder %s201, %s203
      %p210 = scmp.eq.s32.totalorder %s25, 1
      %p211 = por %p209, %p210
      %p212 = scmp.ne.s32.totalorder %s203, %s204
      %p213 = scmp.eq.s32.totalorder %s25, 0
      %p214 = por %p212, %p213
      %p215 = scmp.ne.s32.totalorder %s203, %s204
      %p216 = scmp.eq.s32.totalorder %s26, 1
      %p217 = por %p215, %p216
      %p219 = scmp.ne.s32.totalorder %s204, %s218
      %p220 = scmp.eq.s32.totalorder %s26, 0
      %p221 = por %p219, %p220
      %s222 = ssub.s32 %s20, %s27
      %p223 = scmp.eq.s32.totalorder %s222, 0
      %s225 = sadd.s32 %s224, 1
      %s226 = scalar_select %p223, %s224, %s225
      %p229 = pneg %p223
      %p230 = scmp.eq.s32.totalorder %s20, 1
      %p231 = por %p229, %p230
      %p232 = scmp.ne.s32.totalorder %s224, %s227
      %p233 = scmp.eq.s32.totalorder %s20, 0
      %p234 = por %p232, %p233
      %p235 = scmp.ne.s32.totalorder %s224, %s227
      %p236 = scmp.eq.s32.totalorder %s25, 1
      %p237 = por %p235, %p236
      %p238 = scmp.ne.s32.totalorder %s227, %s228
      %p239 = scmp.eq.s32.totalorder %s25, 0
      %p240 = por %p238, %p239
      %p241 = scmp.ne.s32.totalorder %s227, %s228
      %p242 = scmp.eq.s32.totalorder %s26, 1
      %p243 = por %p241, %p242
      %p245 = scmp.ne.s32.totalorder %s228, %s244
      %p246 = scmp.eq.s32.totalorder %s26, 0
      %p247 = por %p245, %p246
      %p248 = scmp.le.s32.totalorder 1, %s20
      %p249 = scmp.lt.s32.totalorder %s20, 3
      %p250 = pnand %p248, %p249
      %p251 = pneg %p250
      // Predicated region
      $region9: #{tpu_custom_call.1} parent=5 // pred_check
        _
      $region10: #{tpu_custom_call.1} parent=5 // pred_check_branch
        %253 = sbr.rel (%p250) target = $region12
      $region11: #{tpu_custom_call.1} parent=5 // pred_region
        %s254 = ssub.s32 %s20, 1
        // Predicated region
        $region13: #{tpu_custom_call.1} parent=11 // pred_check
          %p255 = pneg %p67
        $region14: #{tpu_custom_call.1} parent=11 // pred_check_branch
          %257 = sbr.rel (%p255) target = $region16
        $region15: #{tpu_custom_call.1} parent=11 // pred_region
          _
        $region16: #{tpu_custom_call.1} parent=11 // pred_fallthru
          _
        // Predicated region
        $region17: #{tpu_custom_call.1} parent=11 // pred_check
          %p258 = pneg %p88
        $region18: #{tpu_custom_call.1} parent=11 // pred_check_branch
          %260 = sbr.rel (%p258) target = $region20
        $region19: #{tpu_custom_call.1} parent=11 // pred_region
          _
        $region20: #{tpu_custom_call.1} parent=11 // pred_fallthru
          _
        // Predicated region
        $region21: #{tpu_custom_call.1} parent=11 // pred_check
          %p261 = pneg %p109
        $region22: #{tpu_custom_call.1} parent=11 // pred_check_branch
          %263 = sbr.rel (%p261) target = $region24
        $region23: #{tpu_custom_call.1} parent=11 // pred_region
          _
        $region24: #{tpu_custom_call.1} parent=11 // pred_fallthru
          _
        // Predicated region
        $region25: #{tpu_custom_call.1} parent=11 // pred_check
          %p264 = pneg %p130
        $region26: #{tpu_custom_call.1} parent=11 // pred_check_branch
          %266 = sbr.rel (%p264) target = $region28
        $region27: #{tpu_custom_call.1} parent=11 // pred_region
          _
        $region28: #{tpu_custom_call.1} parent=11 // pred_fallthru
          _
        // Predicated region
        $region29: #{tpu_custom_call.1} parent=11 // pred_check
          %p267 = pneg %p151
        $region30: #{tpu_custom_call.1} parent=11 // pred_check_branch
          %269 = sbr.rel (%p267) target = $region32
        $region31: #{tpu_custom_call.1} parent=11 // pred_region
          _
        $region32: #{tpu_custom_call.1} parent=11 // pred_fallthru
          _
        // Predicated region
        $region33: #{tpu_custom_call.1} parent=11 // pred_check
          %p270 = pneg %p172
        $region34: #{tpu_custom_call.1} parent=11 // pred_check_branch
          %272 = sbr.rel (%p270) target = $region36
        $region35: #{tpu_custom_call.1} parent=11 // pred_region
          _
        $region36: #{tpu_custom_call.1} parent=11 // pred_fallthru
          _
        // Predicated region
        $region37: #{tpu_custom_call.1} parent=11 // pred_check
          %p273 = pneg %p193
        $region38: #{tpu_custom_call.1} parent=11 // pred_check_branch
          %275 = sbr.rel (%p273) target = $region40
        $region39: #{tpu_custom_call.1} parent=11 // pred_region
          _
        $region40: #{tpu_custom_call.1} parent=11 // pred_fallthru
          _
        // Predicated region
        $region41: #{tpu_custom_call.1} parent=11 // pred_check
          %p276 = pneg %p214
        $region42: #{tpu_custom_call.1} parent=11 // pred_check_branch
          %278 = sbr.rel (%p276) target = $region44
        $region43: #{tpu_custom_call.1} parent=11 // pred_region
          _
        $region44: #{tpu_custom_call.1} parent=11 // pred_fallthru
          _
      $region12: #{tpu_custom_call.1} parent=5 // pred_fallthru
        _
      %p279 = scmp.lt.s32.totalorder %s20, 2
      // Predicated region
      $region45: #{tpu_custom_call.1} parent=5 // pred_check
        %p280 = pneg %p279
      $region46: #{tpu_custom_call.1} parent=5 // pred_check_branch
        %282 = sbr.rel (%p280) target = $region48
      $region47: #{tpu_custom_call.1} parent=5 // pred_region
        // Predicated region
        $region49: #{tpu_custom_call.1} parent=47 // pred_check
          %p283 = pneg %p40
        $region50: #{tpu_custom_call.1} parent=47 // pred_check_branch
          %285 = sbr.rel (%p283) target = $region52
        $region51: #{tpu_custom_call.1} parent=47 // pred_region
          %s286 = smul.u32 64, %s20
          %p287 = scmp.lt.s32.totalorder %s286, 127
          %s288 = scalar_select %p287, %s286, 127
          %s289 = smul.addr %s288, 8
          %s290 = scalar_lea.vmem %s0, %s289
          %s291 = smul.u32 64, %s20
        $region52: #{tpu_custom_call.1} parent=47 // pred_fallthru
          _
      $region48: #{tpu_custom_call.1} parent=5 // pred_fallthru
        _
      %p292 = scmp.le.s32.totalorder 1, %s20
      %p293 = scmp.lt.s32.totalorder %s20, 3
      %p294 = pnand %p292, %p293
      %p295 = pneg %p294
      // Predicated region
      $region53: #{tpu_custom_call.1} parent=5 // pred_check
        _
      $region54: #{tpu_custom_call.1} parent=5 // pred_check_branch
        %297 = sbr.rel (%p294) target = $region56
      $region55: #{tpu_custom_call.1} parent=5 // pred_region
        %s298 = ssub.s32 %s20, 1
        %s299 = smul.u32 64, %s25
        %p300 = scmp.lt.s32.totalorder %s299, 127
        %s301 = scalar_select %p300, %s299, 127
        %s302 = smul.addr %s301, 8
        %s303 = scalar_lea.vmem %s0, %s302
        %p304 = pneg %p46
        %p305 = pneg %p43
        %p306 = pneg %p67
        %p307 = pneg %p64
        %p308 = pneg %p88
        %p309 = pneg %p85
        %p310 = pneg %p109
        %p311 = pneg %p106
        %p312 = pneg %p130
        %p313 = pneg %p127
        %p314 = pneg %p151
        %p315 = pneg %p148
        %p316 = pneg %p172
        %p317 = pneg %p169
        %p318 = pneg %p193
        %p319 = pneg %p190
        %p320 = pneg %p214
        %p321 = pneg %p211
        %p322 = pneg %p240
        %p323 = pneg %p237
        %s324 = sand.u32 %s227, 1
        %s325 = scalar_lea.sflag [#allocation4], %s324
        %s326 = sand.u32 %s227, 1
        %s327 = smul.addr %s326, 4
        %s328 = scalar_lea.vmem [#allocation3], %s327
        %s329 = smul.u32 64, %s25
        %p330 = scmp.lt.s32.totalorder %s329, 127
        %s331 = scalar_select %p330, %s329, 127
        %s332 = smul.addr %s331, 8
        %s333 = scalar_lea.vmem %s0, %s332
        %s334 = smul.u32 64, %s25
        %s335 = smul.u32 4, %s25
        %v336 = vld [vmem:[%s333] sm:$0xff]
        %v337 = vld [vmem:[%s333 + $0x8] sm:$0xff]
        %v338 = vld [vmem:[%s333 + $0x10] sm:$0xff]
        %v339 = vld [vmem:[%s333 + $0x18] sm:$0xff]
        %v340 = vld [vmem:[%s333 + $0x20] sm:$0xff]
        %v341 = vld [vmem:[%s333 + $0x28] sm:$0xff]
        %v342 = vld [vmem:[%s333 + $0x30] sm:$0xff]
        %v343 = vld [vmem:[%s333 + $0x38] sm:$0xff]
        %v344 = vld [vmem:[%s333 + $0x40] sm:$0xff]
        %v345 = vld [vmem:[%s333 + $0x48] sm:$0xff]
        %v346 = vld [vmem:[%s333 + $0x50] sm:$0xff]
        %v347 = vld [vmem:[%s333 + $0x58] sm:$0xff]
        %v348 = vld [vmem:[%s333 + $0x60] sm:$0xff]
        %v349 = vld [vmem:[%s333 + $0x68] sm:$0xff]
        %v350 = vld [vmem:[%s333 + $0x70] sm:$0xff]
        %v351 = vld [vmem:[%s333 + $0x78] sm:$0xff]
        %v352 = vld [vmem:[%s333 + $0x80] sm:$0xff]
        %v353 = vld [vmem:[%s333 + $0x88] sm:$0xff]
        %v354 = vld [vmem:[%s333 + $0x90] sm:$0xff]
        %v355 = vld [vmem:[%s333 + $0x98] sm:$0xff]
        %v356 = vld [vmem:[%s333 + $0xa0] sm:$0xff]
        %v357 = vld [vmem:[%s333 + $0xa8] sm:$0xff]
        %v358 = vld [vmem:[%s333 + $0xb0] sm:$0xff]
        %v359 = vld [vmem:[%s333 + $0xb8] sm:$0xff]
        %v360 = vld [vmem:[%s333 + $0xc0] sm:$0xff]
        %v361 = vld [vmem:[%s333 + $0xc8] sm:$0xff]
        %v362 = vld [vmem:[%s333 + $0xd0] sm:$0xff]
        %v363 = vld [vmem:[%s333 + $0xd8] sm:$0xff]
        %v364 = vld [vmem:[%s333 + $0xe0] sm:$0xff]
        %v365 = vld [vmem:[%s333 + $0xe8] sm:$0xff]
        %v366 = vld [vmem:[%s333 + $0xf0] sm:$0xff]
        %v367 = vld [vmem:[%s333 + $0xf8] sm:$0xff]
        %v368 = vld [vmem:[%s333 + $0x100] sm:$0xff]
        %v369 = vld [vmem:[%s333 + $0x108] sm:$0xff]
        %v370 = vld [vmem:[%s333 + $0x110] sm:$0xff]
        %v371 = vld [vmem:[%s333 + $0x118] sm:$0xff]
        %v372 = vld [vmem:[%s333 + $0x120] sm:$0xff]
        %v373 = vld [vmem:[%s333 + $0x128] sm:$0xff]
        %v374 = vld [vmem:[%s333 + $0x130] sm:$0xff]
        %v375 = vld [vmem:[%s333 + $0x138] sm:$0xff]
        %v376 = vld [vmem:[%s333 + $0x140] sm:$0xff]
        %v377 = vld [vmem:[%s333 + $0x148] sm:$0xff]
        %v378 = vld [vmem:[%s333 + $0x150] sm:$0xff]
        %v379 = vld [vmem:[%s333 + $0x158] sm:$0xff]
        %v380 = vld [vmem:[%s333 + $0x160] sm:$0xff]
        %v381 = vld [vmem:[%s333 + $0x168] sm:$0xff]
        %v382 = vld [vmem:[%s333 + $0x170] sm:$0xff]
        %v383 = vld [vmem:[%s333 + $0x178] sm:$0xff]
        %v384 = vld [vmem:[%s333 + $0x180] sm:$0xff]
        %v385 = vld [vmem:[%s333 + $0x188] sm:$0xff]
        %v386 = vld [vmem:[%s333 + $0x190] sm:$0xff]
        %v387 = vld [vmem:[%s333 + $0x198] sm:$0xff]
        %v388 = vld [vmem:[%s333 + $0x1a0] sm:$0xff]
        %v389 = vld [vmem:[%s333 + $0x1a8] sm:$0xff]
        %v390 = vld [vmem:[%s333 + $0x1b0] sm:$0xff]
        %v391 = vld [vmem:[%s333 + $0x1b8] sm:$0xff]
        %v392 = vld [vmem:[%s333 + $0x1c0] sm:$0xff]
        %v393 = vld [vmem:[%s333 + $0x1c8] sm:$0xff]
        %v394 = vld [vmem:[%s333 + $0x1d0] sm:$0xff]
        %v395 = vld [vmem:[%s333 + $0x1d8] sm:$0xff]
        %v396 = vld [vmem:[%s333 + $0x1e0] sm:$0xff]
        %v397 = vld [vmem:[%s333 + $0x1e8] sm:$0xff]
        %v398 = vld [vmem:[%s333 + $0x1f0] sm:$0xff]
        %v399 = vld [vmem:[%s333 + $0x1f8] sm:$0xff]
        %v400 = vld [vmem:[%s1] sm:$0xff]
        %v401 = vld [vmem:[%s1 + $0x8] sm:$0xff]
        %v402 = vld [vmem:[%s2] sm:$0x1]
        %v404 = vlaneseq
        %v405 = vshrl.u32 %v404, 7
        %v406 = vsub.s32 0, %v405
        %v407 = vrot.slane %v402, %v406
        %vm409 = vcmask 130048
        %v411 = vsel %vm409, %v336, 0
        %v414 = vsel %vm409, %v337, 0
        %v417 = vsel %vm409, %v338, 0
        %v420 = vsel %vm409, %v339, 0
        %v423 = vsel %vm409, %v340, 0
        %v426 = vsel %vm409, %v341, 0
        %v429 = vsel %vm409, %v342, 0
        %v432 = vsel %vm409, %v343, 0
        %v435 = vsel %vm409, %v344, 0
        %v438 = vsel %vm409, %v345, 0
        %v441 = vsel %vm409, %v346, 0
        %v444 = vsel %vm409, %v347, 0
        %v447 = vsel %vm409, %v348, 0
        %v450 = vsel %vm409, %v349, 0
        %v453 = vsel %vm409, %v350, 0
        %v456 = vsel %vm409, %v351, 0
        %v459 = vsel %vm409, %v352, 0
        %v462 = vsel %vm409, %v353, 0
        %v465 = vsel %vm409, %v354, 0
        %v468 = vsel %vm409, %v355, 0
        %v471 = vsel %vm409, %v356, 0
        %v474 = vsel %vm409, %v357, 0
        %v477 = vsel %vm409, %v358, 0
        %v480 = vsel %vm409, %v359, 0
        %v483 = vsel %vm409, %v360, 0
        %v486 = vsel %vm409, %v361, 0
        %v489 = vsel %vm409, %v362, 0
        %v492 = vsel %vm409, %v363, 0
        %v495 = vsel %vm409, %v364, 0
        %v498 = vsel %vm409, %v365, 0
        %v501 = vsel %vm409, %v366, 0
        %v504 = vsel %vm409, %v367, 0
        %v507 = vsel %vm409, %v368, 0
        %v510 = vsel %vm409, %v369, 0
        %v513 = vsel %vm409, %v370, 0
        %v516 = vsel %vm409, %v371, 0
        %v519 = vsel %vm409, %v372, 0
        %v522 = vsel %vm409, %v373, 0
        %v525 = vsel %vm409, %v374, 0
        %v528 = vsel %vm409, %v375, 0
        %v531 = vsel %vm409, %v376, 0
        %v534 = vsel %vm409, %v377, 0
        %v537 = vsel %vm409, %v378, 0
        %v540 = vsel %vm409, %v379, 0
        %v543 = vsel %vm409, %v380, 0
        %v546 = vsel %vm409, %v381, 0
        %v549 = vsel %vm409, %v382, 0
        %v552 = vsel %vm409, %v383, 0
        %v555 = vsel %vm409, %v384, 0
        %v558 = vsel %vm409, %v385, 0
        %v561 = vsel %vm409, %v386, 0
        %v564 = vsel %vm409, %v387, 0
        %v567 = vsel %vm409, %v388, 0
        %v570 = vsel %vm409, %v389, 0
        %v573 = vsel %vm409, %v390, 0
        %v576 = vsel %vm409, %v391, 0
        %v579 = vsel %vm409, %v392, 0
        %v582 = vsel %vm409, %v393, 0
        %v585 = vsel %vm409, %v394, 0
        %v588 = vsel %vm409, %v395, 0
        %v591 = vsel %vm409, %v396, 0
        %v594 = vsel %vm409, %v397, 0
        %v597 = vsel %vm409, %v398, 0
        %v600 = vsel %vm409, %v399, 0
        %602 = vmatprep.subr.mxu0 0.0
        %603 = vmatpush1.msra.mxu0 0.0
        %604 = vmatprep.subr.mxu0 0.0
        %605 = vmatpush1.msra.mxu0 0.0
        %606 = vmatprep.subr.mxu0 0.0
        %607 = vmatpush1.msra.mxu0 0.0
        %608 = vmatprep.subr.mxu0 0.0
        %609 = vmatpush1.msra.mxu0 0.0
        %610 = vmatprep.subr.mxu0 0.0
        %611 = vmatpush1.msra.mxu0 0.0
        %612 = vmatprep.subr.mxu0 0.0
        %613 = vmatpush1.msra.mxu0 0.0
        %614 = vmatprep.subr.mxu0 0.0
        %615 = vmatpush1.msra.mxu0 0.0
        %616 = vmatprep.subr.mxu0 0.0
        %617 = vmatpush1.msra.mxu0 0.0
        %618 = vmatprep.subr.mxu0 0.0
        %619 = vmatpush1.msra.mxu0 0.0
        %620 = vmatprep.subr.mxu0 0.0
        %621 = vmatpush1.msra.mxu0 0.0
        %622 = vmatprep.subr.mxu0 0.0
        %623 = vmatpush1.msra.mxu0 0.0
        %624 = vmatprep.subr.mxu0 0.0
        %625 = vmatpush1.msra.mxu0 0.0
        %626 = vmatprep.subr.mxu0 0.0
        %627 = vmatpush1.msra.mxu0 0.0
        %628 = vmatprep.subr.mxu0 0.0
        %629 = vmatpush1.msra.mxu0 0.0
        %630 = vmatprep.subr.mxu0 0.0
        %631 = vmatpush1.msra.mxu0 %v401
        %632 = vmatprep.subr.mxu0 0.0
        %633 = vmatpush1.msra.mxu0 %v400
        %634 = vmatprep.subr.mxu0 0.0
        %635 = vmatpush2.msra.mxu0 0.0
        %636 = vmatprep.subr.mxu0 0.0
        %637 = vmatpush2.msra.mxu0 0.0
        %638 = vmatprep.subr.mxu0 0.0
        %639 = vmatpush2.msra.mxu0 0.0
        %640 = vmatprep.subr.mxu0 0.0
        %641 = vmatpush2.msra.mxu0 0.0
        %642 = vmatprep.subr.mxu0 0.0
        %643 = vmatpush2.msra.mxu0 0.0
        %644 = vmatprep.subr.mxu0 0.0
        %645 = vmatpush2.msra.mxu0 0.0
        %646 = vmatprep.subr.mxu0 0.0
        %647 = vmatpush2.msra.mxu0 0.0
        %648 = vmatprep.subr.mxu0 0.0
        %649 = vmatpush2.msra.mxu0 0.0
        %650 = vmatprep.subr.mxu0 0.0
        %651 = vmatpush2.msra.mxu0 0.0
        %652 = vmatprep.subr.mxu0 0.0
        %653 = vmatpush2.msra.mxu0 0.0
        %654 = vmatprep.subr.mxu0 0.0
        %655 = vmatpush2.msra.mxu0 0.0
        %656 = vmatprep.subr.mxu0 0.0
        %657 = vmatpush2.msra.mxu0 0.0
        %658 = vmatprep.subr.mxu0 0.0
        %659 = vmatpush2.msra.mxu0 0.0
        %660 = vmatprep.subr.mxu0 0.0
        %661 = vmatpush2.msra.mxu0 0.0
        %662 = vmatprep.subr.mxu0 0.0
        %663 = vmatpush2.msra.mxu0 0.0
        %664 = vmatprep.subr.mxu0 0.0
        %665 = vmatpush2.msra.mxu0 0.0
        %666 = vmatprep.mubr.f32.mxu0 0.0
        %667 = vmatmul.mubr.f32.gmra.mxu0 %v411
        %v668 = vpop.f32.mrf.mxu0
        %v669 = vadd.f32 %v407, %v668
        %v670 = vpop.f32.mrf.mxu0
        %671 = vmatprep.mubr.f32.mxu0 0.0
        %672 = vmatmul.mubr.f32.gmra.mxu0 %v414
        %v673 = vpop.f32.mrf.mxu0
        %v674 = vadd.f32 %v407, %v673
        %v675 = vpop.f32.mrf.mxu0
        %676 = vmatprep.mubr.f32.mxu0 0.0
        %677 = vmatmul.mubr.f32.gmra.mxu0 %v417
        %v678 = vpop.f32.mrf.mxu0
        %v679 = vadd.f32 %v407, %v678
        %v680 = vpop.f32.mrf.mxu0
        %681 = vmatprep.mubr.f32.mxu0 0.0
        %682 = vmatmul.mubr.f32.gmra.mxu0 %v420
        %v683 = vpop.f32.mrf.mxu0
        %v684 = vadd.f32 %v407, %v683
        %v685 = vpop.f32.mrf.mxu0
        %686 = vmatprep.mubr.f32.mxu0 0.0
        %687 = vmatmul.mubr.f32.gmra.mxu0 %v423
        %v688 = vpop.f32.mrf.mxu0
        %v689 = vadd.f32 %v407, %v688
        %v690 = vpop.f32.mrf.mxu0
        %691 = vmatprep.mubr.f32.mxu0 0.0
        %692 = vmatmul.mubr.f32.gmra.mxu0 %v426
        %v693 = vpop.f32.mrf.mxu0
        %v694 = vadd.f32 %v407, %v693
        %v695 = vpop.f32.mrf.mxu0
        %696 = vmatprep.mubr.f32.mxu0 0.0
        %697 = vmatmul.mubr.f32.gmra.mxu0 %v429
        %v698 = vpop.f32.mrf.mxu0
        %v699 = vadd.f32 %v407, %v698
        %v700 = vpop.f32.mrf.mxu0
        %701 = vmatprep.mubr.f32.mxu0 0.0
        %702 = vmatmul.mubr.f32.gmra.mxu0 %v432
        %v703 = vpop.f32.mrf.mxu0
        %v704 = vadd.f32 %v407, %v703
        %v705 = vpop.f32.mrf.mxu0
        %706 = vmatprep.mubr.f32.mxu0 0.0
        %707 = vmatmul.mubr.f32.gmra.mxu0 %v435
        %v708 = vpop.f32.mrf.mxu0
        %v709 = vadd.f32 %v407, %v708
        %v710 = vpop.f32.mrf.mxu0
        %711 = vmatprep.mubr.f32.mxu0 0.0
        %712 = vmatmul.mubr.f32.gmra.mxu0 %v438
        %v713 = vpop.f32.mrf.mxu0
        %v714 = vadd.f32 %v407, %v713
        %v715 = vpop.f32.mrf.mxu0
        %716 = vmatprep.mubr.f32.mxu0 0.0
        %717 = vmatmul.mubr.f32.gmra.mxu0 %v441
        %v718 = vpop.f32.mrf.mxu0
        %v719 = vadd.f32 %v407, %v718
        %v720 = vpop.f32.mrf.mxu0
        %721 = vmatprep.mubr.f32.mxu0 0.0
        %722 = vmatmul.mubr.f32.gmra.mxu0 %v444
        %v723 = vpop.f32.mrf.mxu0
        %v724 = vadd.f32 %v407, %v723
        %v725 = vpop.f32.mrf.mxu0
        %726 = vmatprep.mubr.f32.mxu0 0.0
        %727 = vmatmul.mubr.f32.gmra.mxu0 %v447
        %v728 = vpop.f32.mrf.mxu0
        %v729 = vadd.f32 %v407, %v728
        %v730 = vpop.f32.mrf.mxu0
        %731 = vmatprep.mubr.f32.mxu0 0.0
        %732 = vmatmul.mubr.f32.gmra.mxu0 %v450
        %v733 = vpop.f32.mrf.mxu0
        %v734 = vadd.f32 %v407, %v733
        %v735 = vpop.f32.mrf.mxu0
        %736 = vmatprep.mubr.f32.mxu0 0.0
        %737 = vmatmul.mubr.f32.gmra.mxu0 %v453
        %v738 = vpop.f32.mrf.mxu0
        %v739 = vadd.f32 %v407, %v738
        %v740 = vpop.f32.mrf.mxu0
        %741 = vmatprep.mubr.f32.mxu0 0.0
        %742 = vmatmul.mubr.f32.gmra.mxu0 %v456
        %v743 = vpop.f32.mrf.mxu0
        %v744 = vadd.f32 %v407, %v743
        %v745 = vpop.f32.mrf.mxu0
        %746 = vmatprep.mubr.f32.mxu0 0.0
        %747 = vmatmul.mubr.f32.gmra.mxu0 %v459
        %v748 = vpop.f32.mrf.mxu0
        %v749 = vadd.f32 %v407, %v748
        %v750 = vpop.f32.mrf.mxu0
        %751 = vmatprep.mubr.f32.mxu0 0.0
        %752 = vmatmul.mubr.f32.gmra.mxu0 %v462
        %v753 = vpop.f32.mrf.mxu0
        %v754 = vadd.f32 %v407, %v753
        %v755 = vpop.f32.mrf.mxu0
        %756 = vmatprep.mubr.f32.mxu0 0.0
        %757 = vmatmul.mubr.f32.gmra.mxu0 %v465
        %v758 = vpop.f32.mrf.mxu0
        %v759 = vadd.f32 %v407, %v758
        %v760 = vpop.f32.mrf.mxu0
        %761 = vmatprep.mubr.f32.mxu0 0.0
        %762 = vmatmul.mubr.f32.gmra.mxu0 %v468
        %v763 = vpop.f32.mrf.mxu0
        %v764 = vadd.f32 %v407, %v763
        %v765 = vpop.f32.mrf.mxu0
        %766 = vmatprep.mubr.f32.mxu0 0.0
        %767 = vmatmul.mubr.f32.gmra.mxu0 %v471
        %v768 = vpop.f32.mrf.mxu0
        %v769 = vadd.f32 %v407, %v768
        %v770 = vpop.f32.mrf.mxu0
        %771 = vmatprep.mubr.f32.mxu0 0.0
        %772 = vmatmul.mubr.f32.gmra.mxu0 %v474
        %v773 = vpop.f32.mrf.mxu0
        %v774 = vadd.f32 %v407, %v773
        %v775 = vpop.f32.mrf.mxu0
        %776 = vmatprep.mubr.f32.mxu0 0.0
        %777 = vmatmul.mubr.f32.gmra.mxu0 %v477
        %v778 = vpop.f32.mrf.mxu0
        %v779 = vadd.f32 %v407, %v778
        %v780 = vpop.f32.mrf.mxu0
        %781 = vmatprep.mubr.f32.mxu0 0.0
        %782 = vmatmul.mubr.f32.gmra.mxu0 %v480
        %v783 = vpop.f32.mrf.mxu0
        %v784 = vadd.f32 %v407, %v783
        %v785 = vpop.f32.mrf.mxu0
        %786 = vmatprep.mubr.f32.mxu0 0.0
        %787 = vmatmul.mubr.f32.gmra.mxu0 %v483
        %v788 = vpop.f32.mrf.mxu0
        %v789 = vadd.f32 %v407, %v788
        %v790 = vpop.f32.mrf.mxu0
        %791 = vmatprep.mubr.f32.mxu0 0.0
        %792 = vmatmul.mubr.f32.gmra.mxu0 %v486
        %v793 = vpop.f32.mrf.mxu0
        %v794 = vadd.f32 %v407, %v793
        %v795 = vpop.f32.mrf.mxu0
        %796 = vmatprep.mubr.f32.mxu0 0.0
        %797 = vmatmul.mubr.f32.gmra.mxu0 %v489
        %v798 = vpop.f32.mrf.mxu0
        %v799 = vadd.f32 %v407, %v798
        %v800 = vpop.f32.mrf.mxu0
        %801 = vmatprep.mubr.f32.mxu0 0.0
        %802 = vmatmul.mubr.f32.gmra.mxu0 %v492
        %v803 = vpop.f32.mrf.mxu0
        %v804 = vadd.f32 %v407, %v803
        %v805 = vpop.f32.mrf.mxu0
        %806 = vmatprep.mubr.f32.mxu0 0.0
        %807 = vmatmul.mubr.f32.gmra.mxu0 %v495
        %v808 = vpop.f32.mrf.mxu0
        %v809 = vadd.f32 %v407, %v808
        %v810 = vpop.f32.mrf.mxu0
        %811 = vmatprep.mubr.f32.mxu0 0.0
        %812 = vmatmul.mubr.f32.gmra.mxu0 %v498
        %v813 = vpop.f32.mrf.mxu0
        %v814 = vadd.f32 %v407, %v813
        %v815 = vpop.f32.mrf.mxu0
        %816 = vmatprep.mubr.f32.mxu0 0.0
        %817 = vmatmul.mubr.f32.gmra.mxu0 %v501
        %v818 = vpop.f32.mrf.mxu0
        %v819 = vadd.f32 %v407, %v818
        %v820 = vpop.f32.mrf.mxu0
        %821 = vmatprep.mubr.f32.mxu0 0.0
        %822 = vmatmul.mubr.f32.gmra.mxu0 %v504
        %v823 = vpop.f32.mrf.mxu0
        %v824 = vadd.f32 %v407, %v823
        %v825 = vpop.f32.mrf.mxu0
        %826 = vmatprep.mubr.f32.mxu0 0.0
        %827 = vmatmul.mubr.f32.gmra.mxu0 %v507
        %v828 = vpop.f32.mrf.mxu0
        %v829 = vadd.f32 %v407, %v828
        %v830 = vpop.f32.mrf.mxu0
        %831 = vmatprep.mubr.f32.mxu0 0.0
        %832 = vmatmul.mubr.f32.gmra.mxu0 %v510
        %v833 = vpop.f32.mrf.mxu0
        %v834 = vadd.f32 %v407, %v833
        %v835 = vpop.f32.mrf.mxu0
        %836 = vmatprep.mubr.f32.mxu0 0.0
        %837 = vmatmul.mubr.f32.gmra.mxu0 %v513
        %v838 = vpop.f32.mrf.mxu0
        %v839 = vadd.f32 %v407, %v838
        %v840 = vpop.f32.mrf.mxu0
        %841 = vmatprep.mubr.f32.mxu0 0.0
        %842 = vmatmul.mubr.f32.gmra.mxu0 %v516
        %v843 = vpop.f32.mrf.mxu0
        %v844 = vadd.f32 %v407, %v843
        %v845 = vpop.f32.mrf.mxu0
        %846 = vmatprep.mubr.f32.mxu0 0.0
        %847 = vmatmul.mubr.f32.gmra.mxu0 %v519
        %v848 = vpop.f32.mrf.mxu0
        %v849 = vadd.f32 %v407, %v848
        %v850 = vpop.f32.mrf.mxu0
        %851 = vmatprep.mubr.f32.mxu0 0.0
        %852 = vmatmul.mubr.f32.gmra.mxu0 %v522
        %v853 = vpop.f32.mrf.mxu0
        %v854 = vadd.f32 %v407, %v853
        %v855 = vpop.f32.mrf.mxu0
        %856 = vmatprep.mubr.f32.mxu0 0.0
        %857 = vmatmul.mubr.f32.gmra.mxu0 %v525
        %v858 = vpop.f32.mrf.mxu0
        %v859 = vadd.f32 %v407, %v858
        %v860 = vpop.f32.mrf.mxu0
        %861 = vmatprep.mubr.f32.mxu0 0.0
        %862 = vmatmul.mubr.f32.gmra.mxu0 %v528
        %v863 = vpop.f32.mrf.mxu0
        %v864 = vadd.f32 %v407, %v863
        %v865 = vpop.f32.mrf.mxu0
        %866 = vmatprep.mubr.f32.mxu0 0.0
        %867 = vmatmul.mubr.f32.gmra.mxu0 %v531
        %v868 = vpop.f32.mrf.mxu0
        %v869 = vadd.f32 %v407, %v868
        %v870 = vpop.f32.mrf.mxu0
        %871 = vmatprep.mubr.f32.mxu0 0.0
        %872 = vmatmul.mubr.f32.gmra.mxu0 %v534
        %v873 = vpop.f32.mrf.mxu0
        %v874 = vadd.f32 %v407, %v873
        %v875 = vpop.f32.mrf.mxu0
        %876 = vmatprep.mubr.f32.mxu0 0.0
        %877 = vmatmul.mubr.f32.gmra.mxu0 %v537
        %v878 = vpop.f32.mrf.mxu0
        %v879 = vadd.f32 %v407, %v878
        %v880 = vpop.f32.mrf.mxu0
        %881 = vmatprep.mubr.f32.mxu0 0.0
        %882 = vmatmul.mubr.f32.gmra.mxu0 %v540
        %v883 = vpop.f32.mrf.mxu0
        %v884 = vadd.f32 %v407, %v883
        %v885 = vpop.f32.mrf.mxu0
        %886 = vmatprep.mubr.f32.mxu0 0.0
        %887 = vmatmul.mubr.f32.gmra.mxu0 %v543
        %v888 = vpop.f32.mrf.mxu0
        %v889 = vadd.f32 %v407, %v888
        %v890 = vpop.f32.mrf.mxu0
        %891 = vmatprep.mubr.f32.mxu0 0.0
        %892 = vmatmul.mubr.f32.gmra.mxu0 %v546
        %v893 = vpop.f32.mrf.mxu0
        %v894 = vadd.f32 %v407, %v893
        %v895 = vpop.f32.mrf.mxu0
        %896 = vmatprep.mubr.f32.mxu0 0.0
        %897 = vmatmul.mubr.f32.gmra.mxu0 %v549
        %v898 = vpop.f32.mrf.mxu0
        %v899 = vadd.f32 %v407, %v898
        %v900 = vpop.f32.mrf.mxu0
        %901 = vmatprep.mubr.f32.mxu0 0.0
        %902 = vmatmul.mubr.f32.gmra.mxu0 %v552
        %v903 = vpop.f32.mrf.mxu0
        %v904 = vadd.f32 %v407, %v903
        %v905 = vpop.f32.mrf.mxu0
        %906 = vmatprep.mubr.f32.mxu0 0.0
        %907 = vmatmul.mubr.f32.gmra.mxu0 %v555
        %v908 = vpop.f32.mrf.mxu0
        %v909 = vadd.f32 %v407, %v908
        %v910 = vpop.f32.mrf.mxu0
        %911 = vmatprep.mubr.f32.mxu0 0.0
        %912 = vmatmul.mubr.f32.gmra.mxu0 %v558
        %v913 = vpop.f32.mrf.mxu0
        %v914 = vadd.f32 %v407, %v913
        %v915 = vpop.f32.mrf.mxu0
        %916 = vmatprep.mubr.f32.mxu0 0.0
        %917 = vmatmul.mubr.f32.gmra.mxu0 %v561
        %v918 = vpop.f32.mrf.mxu0
        %v919 = vadd.f32 %v407, %v918
        %v920 = vpop.f32.mrf.mxu0
        %921 = vmatprep.mubr.f32.mxu0 0.0
        %922 = vmatmul.mubr.f32.gmra.mxu0 %v564
        %v923 = vpop.f32.mrf.mxu0
        %v924 = vadd.f32 %v407, %v923
        %v925 = vpop.f32.mrf.mxu0
        %926 = vmatprep.mubr.f32.mxu0 0.0
        %927 = vmatmul.mubr.f32.gmra.mxu0 %v567
        %v928 = vpop.f32.mrf.mxu0
        %v929 = vadd.f32 %v407, %v928
        %v930 = vpop.f32.mrf.mxu0
        %931 = vmatprep.mubr.f32.mxu0 0.0
        %932 = vmatmul.mubr.f32.gmra.mxu0 %v570
        %v933 = vpop.f32.mrf.mxu0
        %v934 = vadd.f32 %v407, %v933
        %v935 = vpop.f32.mrf.mxu0
        %936 = vmatprep.mubr.f32.mxu0 0.0
        %937 = vmatmul.mubr.f32.gmra.mxu0 %v573
        %v938 = vpop.f32.mrf.mxu0
        %v939 = vadd.f32 %v407, %v938
        %v940 = vpop.f32.mrf.mxu0
        %941 = vmatprep.mubr.f32.mxu0 0.0
        %942 = vmatmul.mubr.f32.gmra.mxu0 %v576
        %v943 = vpop.f32.mrf.mxu0
        %v944 = vadd.f32 %v407, %v943
        %v945 = vpop.f32.mrf.mxu0
        %946 = vmatprep.mubr.f32.mxu0 0.0
        %947 = vmatmul.mubr.f32.gmra.mxu0 %v579
        %v948 = vpop.f32.mrf.mxu0
        %v949 = vadd.f32 %v407, %v948
        %v950 = vpop.f32.mrf.mxu0
        %951 = vmatprep.mubr.f32.mxu0 0.0
        %952 = vmatmul.mubr.f32.gmra.mxu0 %v582
        %v953 = vpop.f32.mrf.mxu0
        %v954 = vadd.f32 %v407, %v953
        %v955 = vpop.f32.mrf.mxu0
        %956 = vmatprep.mubr.f32.mxu0 0.0
        %957 = vmatmul.mubr.f32.gmra.mxu0 %v585
        %v958 = vpop.f32.mrf.mxu0
        %v959 = vadd.f32 %v407, %v958
        %v960 = vpop.f32.mrf.mxu0
        %961 = vmatprep.mubr.f32.mxu0 0.0
        %962 = vmatmul.mubr.f32.gmra.mxu0 %v588
        %v963 = vpop.f32.mrf.mxu0
        %v964 = vadd.f32 %v407, %v963
        %v965 = vpop.f32.mrf.mxu0
        %966 = vmatprep.mubr.f32.mxu0 0.0
        %967 = vmatmul.mubr.f32.gmra.mxu0 %v591
        %v968 = vpop.f32.mrf.mxu0
        %v969 = vadd.f32 %v407, %v968
        %v970 = vpop.f32.mrf.mxu0
        %971 = vmatprep.mubr.f32.mxu0 0.0
        %972 = vmatmul.mubr.f32.gmra.mxu0 %v594
        %v973 = vpop.f32.mrf.mxu0
        %v974 = vadd.f32 %v407, %v973
        %v975 = vpop.f32.mrf.mxu0
        %976 = vmatprep.mubr.f32.mxu0 0.0
        %977 = vmatmul.mubr.f32.gmra.mxu0 %v597
        %v978 = vpop.f32.mrf.mxu0
        %v979 = vadd.f32 %v407, %v978
        %v980 = vpop.f32.mrf.mxu0
        %981 = vmatprep.mubr.f32.mxu0 0.0
        %982 = vmatmul.mubr.f32.gmra.mxu0 %v600
        %v983 = vpop.f32.mrf.mxu0
        %v984 = vadd.f32 %v407, %v983
        %v985 = vpop.f32.mrf.mxu0
        %986 = vdwg.mxu0
        %v987 = vmax.f32 %v669, 0.0
        %v988 = vmax.f32 %v674, 0.0
        %v989 = vmax.f32 %v679, 0.0
        %v990 = vmax.f32 %v684, 0.0
        %v991 = vmax.f32 %v689, 0.0
        %v992 = vmax.f32 %v694, 0.0
        %v993 = vmax.f32 %v699, 0.0
        %v994 = vmax.f32 %v704, 0.0
        %v995 = vmax.f32 %v709, 0.0
        %v996 = vmax.f32 %v714, 0.0
        %v997 = vmax.f32 %v719, 0.0
        %v998 = vmax.f32 %v724, 0.0
        %v999 = vmax.f32 %v729, 0.0
        %v1000 = vmax.f32 %v734, 0.0
        %v1001 = vmax.f32 %v739, 0.0
        %v1002 = vmax.f32 %v744, 0.0
        %v1003 = vmax.f32 %v749, 0.0
        %v1004 = vmax.f32 %v754, 0.0
        %v1005 = vmax.f32 %v759, 0.0
        %v1006 = vmax.f32 %v764, 0.0
        %v1007 = vmax.f32 %v769, 0.0
        %v1008 = vmax.f32 %v774, 0.0
        %v1009 = vmax.f32 %v779, 0.0
        %v1010 = vmax.f32 %v784, 0.0
        %v1011 = vmax.f32 %v789, 0.0
        %v1012 = vmax.f32 %v794, 0.0
        %v1013 = vmax.f32 %v799, 0.0
        %v1014 = vmax.f32 %v804, 0.0
        %v1015 = vmax.f32 %v809, 0.0
        %v1016 = vmax.f32 %v814, 0.0
        %v1017 = vmax.f32 %v819, 0.0
        %v1018 = vmax.f32 %v824, 0.0
        %v1019 = vmax.f32 %v829, 0.0
        %v1020 = vmax.f32 %v834, 0.0
        %v1021 = vmax.f32 %v839, 0.0
        %v1022 = vmax.f32 %v844, 0.0
        %v1023 = vmax.f32 %v849, 0.0
        %v1024 = vmax.f32 %v854, 0.0
        %v1025 = vmax.f32 %v859, 0.0
        %v1026 = vmax.f32 %v864, 0.0
        %v1027 = vmax.f32 %v869, 0.0
        %v1028 = vmax.f32 %v874, 0.0
        %v1029 = vmax.f32 %v879, 0.0
        %v1030 = vmax.f32 %v884, 0.0
        %v1031 = vmax.f32 %v889, 0.0
        %v1032 = vmax.f32 %v894, 0.0
        %v1033 = vmax.f32 %v899, 0.0
        %v1034 = vmax.f32 %v904, 0.0
        %v1035 = vmax.f32 %v909, 0.0
        %v1036 = vmax.f32 %v914, 0.0
        %v1037 = vmax.f32 %v919, 0.0
        %v1038 = vmax.f32 %v924, 0.0
        %v1039 = vmax.f32 %v929, 0.0
        %v1040 = vmax.f32 %v934, 0.0
        %v1041 = vmax.f32 %v939, 0.0
        %v1042 = vmax.f32 %v944, 0.0
        %v1043 = vmax.f32 %v949, 0.0
        %v1044 = vmax.f32 %v954, 0.0
        %v1045 = vmax.f32 %v959, 0.0
        %v1046 = vmax.f32 %v964, 0.0
        %v1047 = vmax.f32 %v969, 0.0
        %v1048 = vmax.f32 %v974, 0.0
        %v1049 = vmax.f32 %v979, 0.0
        %v1050 = vmax.f32 %v984, 0.0
        %v1051 = vld [vmem:[%s3] sm:$0xff]
        %v1052 = vld [vmem:[%s3 + $0x8] sm:$0xff]
        %v1053 = vld [vmem:[%s3 + $0x10] sm:$0xff]
        %v1054 = vld [vmem:[%s3 + $0x18] sm:$0xff]
        %v1055 = vld [vmem:[%s3 + $0x20] sm:$0xff]
        %v1056 = vld [vmem:[%s3 + $0x28] sm:$0xff]
        %v1057 = vld [vmem:[%s3 + $0x30] sm:$0xff]
        %v1058 = vld [vmem:[%s3 + $0x38] sm:$0xff]
        %v1059 = vld [vmem:[%s3 + $0x40] sm:$0xff]
        %v1060 = vld [vmem:[%s3 + $0x48] sm:$0xff]
        %v1061 = vld [vmem:[%s3 + $0x50] sm:$0xff]
        %v1062 = vld [vmem:[%s3 + $0x58] sm:$0xff]
        %v1063 = vld [vmem:[%s3 + $0x60] sm:$0xff]
        %v1064 = vld [vmem:[%s3 + $0x68] sm:$0xff]
        %v1065 = vld [vmem:[%s3 + $0x70] sm:$0xff]
        %v1066 = vld [vmem:[%s3 + $0x78] sm:$0xff]
        %v1067 = vld [vmem:[%s4] sm:$0x1]
        %v1069 = vlaneseq
        %v1070 = vshrl.u32 %v1069, 7
        %v1071 = vsub.s32 0, %v1070
        %v1072 = vrot.slane %v1067, %v1071
        %1074 = vmatprep.subr.mxu0 0.0
        %1075 = vmatpush1.msra.mxu0 %v1066
        %1076 = vmatprep.subr.mxu0 0.0
        %1077 = vmatpush1.msra.mxu0 %v1065
        %1078 = vmatprep.subr.mxu0 0.0
        %1079 = vmatpush1.msra.mxu0 %v1064
        %1080 = vmatprep.subr.mxu0 0.0
        %1081 = vmatpush1.msra.mxu0 %v1063
        %1082 = vmatprep.subr.mxu0 0.0
        %1083 = vmatpush1.msra.mxu0 %v1062
        %1084 = vmatprep.subr.mxu0 0.0
        %1085 = vmatpush1.msra.mxu0 %v1061
        %1086 = vmatprep.subr.mxu0 0.0
        %1087 = vmatpush1.msra.mxu0 %v1060
        %1088 = vmatprep.subr.mxu0 0.0
        %1089 = vmatpush1.msra.mxu0 %v1059
        %1090 = vmatprep.subr.mxu0 0.0
        %1091 = vmatpush1.msra.mxu0 %v1058
        %1092 = vmatprep.subr.mxu0 0.0
        %1093 = vmatpush1.msra.mxu0 %v1057
        %1094 = vmatprep.subr.mxu0 0.0
        %1095 = vmatpush1.msra.mxu0 %v1056
        %1096 = vmatprep.subr.mxu0 0.0
        %1097 = vmatpush1.msra.mxu0 %v1055
        %1098 = vmatprep.subr.mxu0 0.0
        %1099 = vmatpush1.msra.mxu0 %v1054
        %1100 = vmatprep.subr.mxu0 0.0
        %1101 = vmatpush1.msra.mxu0 %v1053
        %1102 = vmatprep.subr.mxu0 0.0
        %1103 = vmatpush1.msra.mxu0 %v1052
        %1104 = vmatprep.subr.mxu0 0.0
        %1105 = vmatpush1.msra.mxu0 %v1051
        %1106 = vmatprep.subr.mxu0 0.0
        %1107 = vmatpush2.msra.mxu0 0.0
        %1108 = vmatprep.subr.mxu0 0.0
        %1109 = vmatpush2.msra.mxu0 0.0
        %1110 = vmatprep.subr.mxu0 0.0
        %1111 = vmatpush2.msra.mxu0 0.0
        %1112 = vmatprep.subr.mxu0 0.0
        %1113 = vmatpush2.msra.mxu0 0.0
        %1114 = vmatprep.subr.mxu0 0.0
        %1115 = vmatpush2.msra.mxu0 0.0
        %1116 = vmatprep.subr.mxu0 0.0
        %1117 = vmatpush2.msra.mxu0 0.0
        %1118 = vmatprep.subr.mxu0 0.0
        %1119 = vmatpush2.msra.mxu0 0.0
        %1120 = vmatprep.subr.mxu0 0.0
        %1121 = vmatpush2.msra.mxu0 0.0
        %1122 = vmatprep.subr.mxu0 0.0
        %1123 = vmatpush2.msra.mxu0 0.0
        %1124 = vmatprep.subr.mxu0 0.0
        %1125 = vmatpush2.msra.mxu0 0.0
        %1126 = vmatprep.subr.mxu0 0.0
        %1127 = vmatpush2.msra.mxu0 0.0
        %1128 = vmatprep.subr.mxu0 0.0
        %1129 = vmatpush2.msra.mxu0 0.0
        %1130 = vmatprep.subr.mxu0 0.0
        %1131 = vmatpush2.msra.mxu0 0.0
        %1132 = vmatprep.subr.mxu0 0.0
        %1133 = vmatpush2.msra.mxu0 0.0
        %1134 = vmatprep.subr.mxu0 0.0
        %1135 = vmatpush2.msra.mxu0 0.0
        %1136 = vmatprep.subr.mxu0 0.0
        %1137 = vmatpush2.msra.mxu0 0.0
        %1138 = vmatprep.mubr.f32.mxu0 0.0
        %1139 = vmatmul.mubr.f32.gmra.mxu0 %v987
        %v1140 = vpop.f32.mrf.mxu0
        %v1141 = vadd.f32 %v1072, %v1140
        %v1142 = vpop.f32.mrf.mxu0
        %1143 = vmatprep.mubr.f32.mxu0 0.0
        %1144 = vmatmul.mubr.f32.gmra.mxu0 %v988
        %v1145 = vpop.f32.mrf.mxu0
        %v1146 = vadd.f32 %v1072, %v1145
        %v1147 = vpop.f32.mrf.mxu0
        %1148 = vmatprep.mubr.f32.mxu0 0.0
        %1149 = vmatmul.mubr.f32.gmra.mxu0 %v989
        %v1150 = vpop.f32.mrf.mxu0
        %v1151 = vadd.f32 %v1072, %v1150
        %v1152 = vpop.f32.mrf.mxu0
        %1153 = vmatprep.mubr.f32.mxu0 0.0
        %1154 = vmatmul.mubr.f32.gmra.mxu0 %v990
        %v1155 = vpop.f32.mrf.mxu0
        %v1156 = vadd.f32 %v1072, %v1155
        %v1157 = vpop.f32.mrf.mxu0
        %1158 = vmatprep.mubr.f32.mxu0 0.0
        %1159 = vmatmul.mubr.f32.gmra.mxu0 %v991
        %v1160 = vpop.f32.mrf.mxu0
        %v1161 = vadd.f32 %v1072, %v1160
        %v1162 = vpop.f32.mrf.mxu0
        %1163 = vmatprep.mubr.f32.mxu0 0.0
        %1164 = vmatmul.mubr.f32.gmra.mxu0 %v992
        %v1165 = vpop.f32.mrf.mxu0
        %v1166 = vadd.f32 %v1072, %v1165
        %v1167 = vpop.f32.mrf.mxu0
        %1168 = vmatprep.mubr.f32.mxu0 0.0
        %1169 = vmatmul.mubr.f32.gmra.mxu0 %v993
        %v1170 = vpop.f32.mrf.mxu0
        %v1171 = vadd.f32 %v1072, %v1170
        %v1172 = vpop.f32.mrf.mxu0
        %1173 = vmatprep.mubr.f32.mxu0 0.0
        %1174 = vmatmul.mubr.f32.gmra.mxu0 %v994
        %v1175 = vpop.f32.mrf.mxu0
        %v1176 = vadd.f32 %v1072, %v1175
        %v1177 = vpop.f32.mrf.mxu0
        %1178 = vmatprep.mubr.f32.mxu0 0.0
        %1179 = vmatmul.mubr.f32.gmra.mxu0 %v995
        %v1180 = vpop.f32.mrf.mxu0
        %v1181 = vadd.f32 %v1072, %v1180
        %v1182 = vpop.f32.mrf.mxu0
        %1183 = vmatprep.mubr.f32.mxu0 0.0
        %1184 = vmatmul.mubr.f32.gmra.mxu0 %v996
        %v1185 = vpop.f32.mrf.mxu0
        %v1186 = vadd.f32 %v1072, %v1185
        %v1187 = vpop.f32.mrf.mxu0
        %1188 = vmatprep.mubr.f32.mxu0 0.0
        %1189 = vmatmul.mubr.f32.gmra.mxu0 %v997
        %v1190 = vpop.f32.mrf.mxu0
        %v1191 = vadd.f32 %v1072, %v1190
        %v1192 = vpop.f32.mrf.mxu0
        %1193 = vmatprep.mubr.f32.mxu0 0.0
        %1194 = vmatmul.mubr.f32.gmra.mxu0 %v998
        %v1195 = vpop.f32.mrf.mxu0
        %v1196 = vadd.f32 %v1072, %v1195
        %v1197 = vpop.f32.mrf.mxu0
        %1198 = vmatprep.mubr.f32.mxu0 0.0
        %1199 = vmatmul.mubr.f32.gmra.mxu0 %v999
        %v1200 = vpop.f32.mrf.mxu0
        %v1201 = vadd.f32 %v1072, %v1200
        %v1202 = vpop.f32.mrf.mxu0
        %1203 = vmatprep.mubr.f32.mxu0 0.0
        %1204 = vmatmul.mubr.f32.gmra.mxu0 %v1000
        %v1205 = vpop.f32.mrf.mxu0
        %v1206 = vadd.f32 %v1072, %v1205
        %v1207 = vpop.f32.mrf.mxu0
        %1208 = vmatprep.mubr.f32.mxu0 0.0
        %1209 = vmatmul.mubr.f32.gmra.mxu0 %v1001
        %v1210 = vpop.f32.mrf.mxu0
        %v1211 = vadd.f32 %v1072, %v1210
        %v1212 = vpop.f32.mrf.mxu0
        %1213 = vmatprep.mubr.f32.mxu0 0.0
        %1214 = vmatmul.mubr.f32.gmra.mxu0 %v1002
        %v1215 = vpop.f32.mrf.mxu0
        %v1216 = vadd.f32 %v1072, %v1215
        %v1217 = vpop.f32.mrf.mxu0
        %1218 = vmatprep.mubr.f32.mxu0 0.0
        %1219 = vmatmul.mubr.f32.gmra.mxu0 %v1003
        %v1220 = vpop.f32.mrf.mxu0
        %v1221 = vadd.f32 %v1072, %v1220
        %v1222 = vpop.f32.mrf.mxu0
        %1223 = vmatprep.mubr.f32.mxu0 0.0
        %1224 = vmatmul.mubr.f32.gmra.mxu0 %v1004
        %v1225 = vpop.f32.mrf.mxu0
        %v1226 = vadd.f32 %v1072, %v1225
        %v1227 = vpop.f32.mrf.mxu0
        %1228 = vmatprep.mubr.f32.mxu0 0.0
        %1229 = vmatmul.mubr.f32.gmra.mxu0 %v1005
        %v1230 = vpop.f32.mrf.mxu0
        %v1231 = vadd.f32 %v1072, %v1230
        %v1232 = vpop.f32.mrf.mxu0
        %1233 = vmatprep.mubr.f32.mxu0 0.0
        %1234 = vmatmul.mubr.f32.gmra.mxu0 %v1006
        %v1235 = vpop.f32.mrf.mxu0
        %v1236 = vadd.f32 %v1072, %v1235
        %v1237 = vpop.f32.mrf.mxu0
        %1238 = vmatprep.mubr.f32.mxu0 0.0
        %1239 = vmatmul.mubr.f32.gmra.mxu0 %v1007
        %v1240 = vpop.f32.mrf.mxu0
        %v1241 = vadd.f32 %v1072, %v1240
        %v1242 = vpop.f32.mrf.mxu0
        %1243 = vmatprep.mubr.f32.mxu0 0.0
        %1244 = vmatmul.mubr.f32.gmra.mxu0 %v1008
        %v1245 = vpop.f32.mrf.mxu0
        %v1246 = vadd.f32 %v1072, %v1245
        %v1247 = vpop.f32.mrf.mxu0
        %1248 = vmatprep.mubr.f32.mxu0 0.0
        %1249 = vmatmul.mubr.f32.gmra.mxu0 %v1009
        %v1250 = vpop.f32.mrf.mxu0
        %v1251 = vadd.f32 %v1072, %v1250
        %v1252 = vpop.f32.mrf.mxu0
        %1253 = vmatprep.mubr.f32.mxu0 0.0
        %1254 = vmatmul.mubr.f32.gmra.mxu0 %v1010
        %v1255 = vpop.f32.mrf.mxu0
        %v1256 = vadd.f32 %v1072, %v1255
        %v1257 = vpop.f32.mrf.mxu0
        %1258 = vmatprep.mubr.f32.mxu0 0.0
        %1259 = vmatmul.mubr.f32.gmra.mxu0 %v1011
        %v1260 = vpop.f32.mrf.mxu0
        %v1261 = vadd.f32 %v1072, %v1260
        %v1262 = vpop.f32.mrf.mxu0
        %1263 = vmatprep.mubr.f32.mxu0 0.0
        %1264 = vmatmul.mubr.f32.gmra.mxu0 %v1012
        %v1265 = vpop.f32.mrf.mxu0
        %v1266 = vadd.f32 %v1072, %v1265
        %v1267 = vpop.f32.mrf.mxu0
        %1268 = vmatprep.mubr.f32.mxu0 0.0
        %1269 = vmatmul.mubr.f32.gmra.mxu0 %v1013
        %v1270 = vpop.f32.mrf.mxu0
        %v1271 = vadd.f32 %v1072, %v1270
        %v1272 = vpop.f32.mrf.mxu0
        %1273 = vmatprep.mubr.f32.mxu0 0.0
        %1274 = vmatmul.mubr.f32.gmra.mxu0 %v1014
        %v1275 = vpop.f32.mrf.mxu0
        %v1276 = vadd.f32 %v1072, %v1275
        %v1277 = vpop.f32.mrf.mxu0
        %1278 = vmatprep.mubr.f32.mxu0 0.0
        %1279 = vmatmul.mubr.f32.gmra.mxu0 %v1015
        %v1280 = vpop.f32.mrf.mxu0
        %v1281 = vadd.f32 %v1072, %v1280
        %v1282 = vpop.f32.mrf.mxu0
        %1283 = vmatprep.mubr.f32.mxu0 0.0
        %1284 = vmatmul.mubr.f32.gmra.mxu0 %v1016
        %v1285 = vpop.f32.mrf.mxu0
        %v1286 = vadd.f32 %v1072, %v1285
        %v1287 = vpop.f32.mrf.mxu0
        %1288 = vmatprep.mubr.f32.mxu0 0.0
        %1289 = vmatmul.mubr.f32.gmra.mxu0 %v1017
        %v1290 = vpop.f32.mrf.mxu0
        %v1291 = vadd.f32 %v1072, %v1290
        %v1292 = vpop.f32.mrf.mxu0
        %1293 = vmatprep.mubr.f32.mxu0 0.0
        %1294 = vmatmul.mubr.f32.gmra.mxu0 %v1018
        %v1295 = vpop.f32.mrf.mxu0
        %v1296 = vadd.f32 %v1072, %v1295
        %v1297 = vpop.f32.mrf.mxu0
        %1298 = vmatprep.mubr.f32.mxu0 0.0
        %1299 = vmatmul.mubr.f32.gmra.mxu0 %v1019
        %v1300 = vpop.f32.mrf.mxu0
        %v1301 = vadd.f32 %v1072, %v1300
        %v1302 = vpop.f32.mrf.mxu0
        %1303 = vmatprep.mubr.f32.mxu0 0.0
        %1304 = vmatmul.mubr.f32.gmra.mxu0 %v1020
        %v1305 = vpop.f32.mrf.mxu0
        %v1306 = vadd.f32 %v1072, %v1305
        %v1307 = vpop.f32.mrf.mxu0
        %1308 = vmatprep.mubr.f32.mxu0 0.0
        %1309 = vmatmul.mubr.f32.gmra.mxu0 %v1021
        %v1310 = vpop.f32.mrf.mxu0
        %v1311 = vadd.f32 %v1072, %v1310
        %v1312 = vpop.f32.mrf.mxu0
        %1313 = vmatprep.mubr.f32.mxu0 0.0
        %1314 = vmatmul.mubr.f32.gmra.mxu0 %v1022
        %v1315 = vpop.f32.mrf.mxu0
        %v1316 = vadd.f32 %v1072, %v1315
        %v1317 = vpop.f32.mrf.mxu0
        %1318 = vmatprep.mubr.f32.mxu0 0.0
        %1319 = vmatmul.mubr.f32.gmra.mxu0 %v1023
        %v1320 = vpop.f32.mrf.mxu0
        %v1321 = vadd.f32 %v1072, %v1320
        %v1322 = vpop.f32.mrf.mxu0
        %1323 = vmatprep.mubr.f32.mxu0 0.0
        %1324 = vmatmul.mubr.f32.gmra.mxu0 %v1024
        %v1325 = vpop.f32.mrf.mxu0
        %v1326 = vadd.f32 %v1072, %v1325
        %v1327 = vpop.f32.mrf.mxu0
        %1328 = vmatprep.mubr.f32.mxu0 0.0
        %1329 = vmatmul.mubr.f32.gmra.mxu0 %v1025
        %v1330 = vpop.f32.mrf.mxu0
        %v1331 = vadd.f32 %v1072, %v1330
        %v1332 = vpop.f32.mrf.mxu0
        %1333 = vmatprep.mubr.f32.mxu0 0.0
        %1334 = vmatmul.mubr.f32.gmra.mxu0 %v1026
        %v1335 = vpop.f32.mrf.mxu0
        %v1336 = vadd.f32 %v1072, %v1335
        %v1337 = vpop.f32.mrf.mxu0
        %1338 = vmatprep.mubr.f32.mxu0 0.0
        %1339 = vmatmul.mubr.f32.gmra.mxu0 %v1027
        %v1340 = vpop.f32.mrf.mxu0
        %v1341 = vadd.f32 %v1072, %v1340
        %v1342 = vpop.f32.mrf.mxu0
        %1343 = vmatprep.mubr.f32.mxu0 0.0
        %1344 = vmatmul.mubr.f32.gmra.mxu0 %v1028
        %v1345 = vpop.f32.mrf.mxu0
        %v1346 = vadd.f32 %v1072, %v1345
        %v1347 = vpop.f32.mrf.mxu0
        %1348 = vmatprep.mubr.f32.mxu0 0.0
        %1349 = vmatmul.mubr.f32.gmra.mxu0 %v1029
        %v1350 = vpop.f32.mrf.mxu0
        %v1351 = vadd.f32 %v1072, %v1350
        %v1352 = vpop.f32.mrf.mxu0
        %1353 = vmatprep.mubr.f32.mxu0 0.0
        %1354 = vmatmul.mubr.f32.gmra.mxu0 %v1030
        %v1355 = vpop.f32.mrf.mxu0
        %v1356 = vadd.f32 %v1072, %v1355
        %v1357 = vpop.f32.mrf.mxu0
        %1358 = vmatprep.mubr.f32.mxu0 0.0
        %1359 = vmatmul.mubr.f32.gmra.mxu0 %v1031
        %v1360 = vpop.f32.mrf.mxu0
        %v1361 = vadd.f32 %v1072, %v1360
        %v1362 = vpop.f32.mrf.mxu0
        %1363 = vmatprep.mubr.f32.mxu0 0.0
        %1364 = vmatmul.mubr.f32.gmra.mxu0 %v1032
        %v1365 = vpop.f32.mrf.mxu0
        %v1366 = vadd.f32 %v1072, %v1365
        %v1367 = vpop.f32.mrf.mxu0
        %1368 = vmatprep.mubr.f32.mxu0 0.0
        %1369 = vmatmul.mubr.f32.gmra.mxu0 %v1033
        %v1370 = vpop.f32.mrf.mxu0
        %v1371 = vadd.f32 %v1072, %v1370
        %v1372 = vpop.f32.mrf.mxu0
        %1373 = vmatprep.mubr.f32.mxu0 0.0
        %1374 = vmatmul.mubr.f32.gmra.mxu0 %v1034
        %v1375 = vpop.f32.mrf.mxu0
        %v1376 = vadd.f32 %v1072, %v1375
        %v1377 = vpop.f32.mrf.mxu0
        %1378 = vmatprep.mubr.f32.mxu0 0.0
        %1379 = vmatmul.mubr.f32.gmra.mxu0 %v1035
        %v1380 = vpop.f32.mrf.mxu0
        %v1381 = vadd.f32 %v1072, %v1380
        %v1382 = vpop.f32.mrf.mxu0
        %1383 = vmatprep.mubr.f32.mxu0 0.0
        %1384 = vmatmul.mubr.f32.gmra.mxu0 %v1036
        %v1385 = vpop.f32.mrf.mxu0
        %v1386 = vadd.f32 %v1072, %v1385
        %v1387 = vpop.f32.mrf.mxu0
        %1388 = vmatprep.mubr.f32.mxu0 0.0
        %1389 = vmatmul.mubr.f32.gmra.mxu0 %v1037
        %v1390 = vpop.f32.mrf.mxu0
        %v1391 = vadd.f32 %v1072, %v1390
        %v1392 = vpop.f32.mrf.mxu0
        %1393 = vmatprep.mubr.f32.mxu0 0.0
        %1394 = vmatmul.mubr.f32.gmra.mxu0 %v1038
        %v1395 = vpop.f32.mrf.mxu0
        %v1396 = vadd.f32 %v1072, %v1395
        %v1397 = vpop.f32.mrf.mxu0
        %1398 = vmatprep.mubr.f32.mxu0 0.0
        %1399 = vmatmul.mubr.f32.gmra.mxu0 %v1039
        %v1400 = vpop.f32.mrf.mxu0
        %v1401 = vadd.f32 %v1072, %v1400
        %v1402 = vpop.f32.mrf.mxu0
        %1403 = vmatprep.mubr.f32.mxu0 0.0
        %1404 = vmatmul.mubr.f32.gmra.mxu0 %v1040
        %v1405 = vpop.f32.mrf.mxu0
        %v1406 = vadd.f32 %v1072, %v1405
        %v1407 = vpop.f32.mrf.mxu0
        %1408 = vmatprep.mubr.f32.mxu0 0.0
        %1409 = vmatmul.mubr.f32.gmra.mxu0 %v1041
        %v1410 = vpop.f32.mrf.mxu0
        %v1411 = vadd.f32 %v1072, %v1410
        %v1412 = vpop.f32.mrf.mxu0
        %1413 = vmatprep.mubr.f32.mxu0 0.0
        %1414 = vmatmul.mubr.f32.gmra.mxu0 %v1042
        %v1415 = vpop.f32.mrf.mxu0
        %v1416 = vadd.f32 %v1072, %v1415
        %v1417 = vpop.f32.mrf.mxu0
        %1418 = vmatprep.mubr.f32.mxu0 0.0
        %1419 = vmatmul.mubr.f32.gmra.mxu0 %v1043
        %v1420 = vpop.f32.mrf.mxu0
        %v1421 = vadd.f32 %v1072, %v1420
        %v1422 = vpop.f32.mrf.mxu0
        %1423 = vmatprep.mubr.f32.mxu0 0.0
        %1424 = vmatmul.mubr.f32.gmra.mxu0 %v1044
        %v1425 = vpop.f32.mrf.mxu0
        %v1426 = vadd.f32 %v1072, %v1425
        %v1427 = vpop.f32.mrf.mxu0
        %1428 = vmatprep.mubr.f32.mxu0 0.0
        %1429 = vmatmul.mubr.f32.gmra.mxu0 %v1045
        %v1430 = vpop.f32.mrf.mxu0
        %v1431 = vadd.f32 %v1072, %v1430
        %v1432 = vpop.f32.mrf.mxu0
        %1433 = vmatprep.mubr.f32.mxu0 0.0
        %1434 = vmatmul.mubr.f32.gmra.mxu0 %v1046
        %v1435 = vpop.f32.mrf.mxu0
        %v1436 = vadd.f32 %v1072, %v1435
        %v1437 = vpop.f32.mrf.mxu0
        %1438 = vmatprep.mubr.f32.mxu0 0.0
        %1439 = vmatmul.mubr.f32.gmra.mxu0 %v1047
        %v1440 = vpop.f32.mrf.mxu0
        %v1441 = vadd.f32 %v1072, %v1440
        %v1442 = vpop.f32.mrf.mxu0
        %1443 = vmatprep.mubr.f32.mxu0 0.0
        %1444 = vmatmul.mubr.f32.gmra.mxu0 %v1048
        %v1445 = vpop.f32.mrf.mxu0
        %v1446 = vadd.f32 %v1072, %v1445
        %v1447 = vpop.f32.mrf.mxu0
        %1448 = vmatprep.mubr.f32.mxu0 0.0
        %1449 = vmatmul.mubr.f32.gmra.mxu0 %v1049
        %v1450 = vpop.f32.mrf.mxu0
        %v1451 = vadd.f32 %v1072, %v1450
        %v1452 = vpop.f32.mrf.mxu0
        %1453 = vmatprep.mubr.f32.mxu0 0.0
        %1454 = vmatmul.mubr.f32.gmra.mxu0 %v1050
        %v1455 = vpop.f32.mrf.mxu0
        %v1456 = vadd.f32 %v1072, %v1455
        %v1457 = vpop.f32.mrf.mxu0
        %1458 = vdwg.mxu0
        %v1459 = vmax.f32 %v1141, 0.0
        %v1460 = vmax.f32 %v1146, 0.0
        %v1461 = vmax.f32 %v1151, 0.0
        %v1462 = vmax.f32 %v1156, 0.0
        %v1463 = vmax.f32 %v1161, 0.0
        %v1464 = vmax.f32 %v1166, 0.0
        %v1465 = vmax.f32 %v1171, 0.0
        %v1466 = vmax.f32 %v1176, 0.0
        %v1467 = vmax.f32 %v1181, 0.0
        %v1468 = vmax.f32 %v1186, 0.0
        %v1469 = vmax.f32 %v1191, 0.0
        %v1470 = vmax.f32 %v1196, 0.0
        %v1471 = vmax.f32 %v1201, 0.0
        %v1472 = vmax.f32 %v1206, 0.0
        %v1473 = vmax.f32 %v1211, 0.0
        %v1474 = vmax.f32 %v1216, 0.0
        %v1475 = vmax.f32 %v1221, 0.0
        %v1476 = vmax.f32 %v1226, 0.0
        %v1477 = vmax.f32 %v1231, 0.0
        %v1478 = vmax.f32 %v1236, 0.0
        %v1479 = vmax.f32 %v1241, 0.0
        %v1480 = vmax.f32 %v1246, 0.0
        %v1481 = vmax.f32 %v1251, 0.0
        %v1482 = vmax.f32 %v1256, 0.0
        %v1483 = vmax.f32 %v1261, 0.0
        %v1484 = vmax.f32 %v1266, 0.0
        %v1485 = vmax.f32 %v1271, 0.0
        %v1486 = vmax.f32 %v1276, 0.0
        %v1487 = vmax.f32 %v1281, 0.0
        %v1488 = vmax.f32 %v1286, 0.0
        %v1489 = vmax.f32 %v1291, 0.0
        %v1490 = vmax.f32 %v1296, 0.0
        %v1491 = vmax.f32 %v1301, 0.0
        %v1492 = vmax.f32 %v1306, 0.0
        %v1493 = vmax.f32 %v1311, 0.0
        %v1494 = vmax.f32 %v1316, 0.0
        %v1495 = vmax.f32 %v1321, 0.0
        %v1496 = vmax.f32 %v1326, 0.0
        %v1497 = vmax.f32 %v1331, 0.0
        %v1498 = vmax.f32 %v1336, 0.0
        %v1499 = vmax.f32 %v1341, 0.0
        %v1500 = vmax.f32 %v1346, 0.0
        %v1501 = vmax.f32 %v1351, 0.0
        %v1502 = vmax.f32 %v1356, 0.0
        %v1503 = vmax.f32 %v1361, 0.0
        %v1504 = vmax.f32 %v1366, 0.0
        %v1505 = vmax.f32 %v1371, 0.0
        %v1506 = vmax.f32 %v1376, 0.0
        %v1507 = vmax.f32 %v1381, 0.0
        %v1508 = vmax.f32 %v1386, 0.0
        %v1509 = vmax.f32 %v1391, 0.0
        %v1510 = vmax.f32 %v1396, 0.0
        %v1511 = vmax.f32 %v1401, 0.0
        %v1512 = vmax.f32 %v1406, 0.0
        %v1513 = vmax.f32 %v1411, 0.0
        %v1514 = vmax.f32 %v1416, 0.0
        %v1515 = vmax.f32 %v1421, 0.0
        %v1516 = vmax.f32 %v1426, 0.0
        %v1517 = vmax.f32 %v1431, 0.0
        %v1518 = vmax.f32 %v1436, 0.0
        %v1519 = vmax.f32 %v1441, 0.0
        %v1520 = vmax.f32 %v1446, 0.0
        %v1521 = vmax.f32 %v1451, 0.0
        %v1522 = vmax.f32 %v1456, 0.0
        %v1523 = vld [vmem:[%s5] sm:$0xff]
        %v1524 = vld [vmem:[%s5 + $0x8] sm:$0xff]
        %v1525 = vld [vmem:[%s5 + $0x10] sm:$0xff]
        %v1526 = vld [vmem:[%s5 + $0x18] sm:$0xff]
        %v1527 = vld [vmem:[%s5 + $0x20] sm:$0xff]
        %v1528 = vld [vmem:[%s5 + $0x28] sm:$0xff]
        %v1529 = vld [vmem:[%s5 + $0x30] sm:$0xff]
        %v1530 = vld [vmem:[%s5 + $0x38] sm:$0xff]
        %v1531 = vld [vmem:[%s6] sm:$0x1]
        %v1533 = vlaneseq
        %v1534 = vshrl.u32 %v1533, 7
        %v1535 = vsub.s32 0, %v1534
        %v1536 = vrot.slane %v1531, %v1535
        %vm1538 = vcmask 523264
        %v1540 = vsel %vm1538, %v1459, 0
        %v1543 = vsel %vm1538, %v1460, 0
        %v1546 = vsel %vm1538, %v1461, 0
        %v1549 = vsel %vm1538, %v1462, 0
        %v1552 = vsel %vm1538, %v1463, 0
        %v1555 = vsel %vm1538, %v1464, 0
        %v1558 = vsel %vm1538, %v1465, 0
        %v1561 = vsel %vm1538, %v1466, 0
        %v1564 = vsel %vm1538, %v1467, 0
        %v1567 = vsel %vm1538, %v1468, 0
        %v1570 = vsel %vm1538, %v1469, 0
        %v1573 = vsel %vm1538, %v1470, 0
        %v1576 = vsel %vm1538, %v1471, 0
        %v1579 = vsel %vm1538, %v1472, 0
        %v1582 = vsel %vm1538, %v1473, 0
        %v1585 = vsel %vm1538, %v1474, 0
        %v1588 = vsel %vm1538, %v1475, 0
        %v1591 = vsel %vm1538, %v1476, 0
        %v1594 = vsel %vm1538, %v1477, 0
        %v1597 = vsel %vm1538, %v1478, 0
        %v1600 = vsel %vm1538, %v1479, 0
        %v1603 = vsel %vm1538, %v1480, 0
        %v1606 = vsel %vm1538, %v1481, 0
        %v1609 = vsel %vm1538, %v1482, 0
        %v1612 = vsel %vm1538, %v1483, 0
        %v1615 = vsel %vm1538, %v1484, 0
        %v1618 = vsel %vm1538, %v1485, 0
        %v1621 = vsel %vm1538, %v1486, 0
        %v1624 = vsel %vm1538, %v1487, 0
        %v1627 = vsel %vm1538, %v1488, 0
        %v1630 = vsel %vm1538, %v1489, 0
        %v1633 = vsel %vm1538, %v1490, 0
        %v1636 = vsel %vm1538, %v1491, 0
        %v1639 = vsel %vm1538, %v1492, 0
        %v1642 = vsel %vm1538, %v1493, 0
        %v1645 = vsel %vm1538, %v1494, 0
        %v1648 = vsel %vm1538, %v1495, 0
        %v1651 = vsel %vm1538, %v1496, 0
        %v1654 = vsel %vm1538, %v1497, 0
        %v1657 = vsel %vm1538, %v1498, 0
        %v1660 = vsel %vm1538, %v1499, 0
        %v1663 = vsel %vm1538, %v1500, 0
        %v1666 = vsel %vm1538, %v1501, 0
        %v1669 = vsel %vm1538, %v1502, 0
        %v1672 = vsel %vm1538, %v1503, 0
        %v1675 = vsel %vm1538, %v1504, 0
        %v1678 = vsel %vm1538, %v1505, 0
        %v1681 = vsel %vm1538, %v1506, 0
        %v1684 = vsel %vm1538, %v1507, 0
        %v1687 = vsel %vm1538, %v1508, 0
        %v1690 = vsel %vm1538, %v1509, 0
        %v1693 = vsel %vm1538, %v1510, 0
        %v1696 = vsel %vm1538, %v1511, 0
        %v1699 = vsel %vm1538, %v1512, 0
        %v1702 = vsel %vm1538, %v1513, 0
        %v1705 = vsel %vm1538, %v1514, 0
        %v1708 = vsel %vm1538, %v1515, 0
        %v1711 = vsel %vm1538, %v1516, 0
        %v1714 = vsel %vm1538, %v1517, 0
        %v1717 = vsel %vm1538, %v1518, 0
        %v1720 = vsel %vm1538, %v1519, 0
        %v1723 = vsel %vm1538, %v1520, 0
        %v1726 = vsel %vm1538, %v1521, 0
        %v1729 = vsel %vm1538, %v1522, 0
        %1731 = vmatprep.subr.mxu0 0.0
        %1732 = vmatpush1.msra.mxu0 0.0
        %1733 = vmatprep.subr.mxu0 0.0
        %1734 = vmatpush1.msra.mxu0 0.0
        %1735 = vmatprep.subr.mxu0 0.0
        %1736 = vmatpush1.msra.mxu0 0.0
        %1737 = vmatprep.subr.mxu0 0.0
        %1738 = vmatpush1.msra.mxu0 0.0
        %1739 = vmatprep.subr.mxu0 0.0
        %1740 = vmatpush1.msra.mxu0 0.0
        %1741 = vmatprep.subr.mxu0 0.0
        %1742 = vmatpush1.msra.mxu0 0.0
        %1743 = vmatprep.subr.mxu0 0.0
        %1744 = vmatpush1.msra.mxu0 0.0
        %1745 = vmatprep.subr.mxu0 0.0
        %1746 = vmatpush1.msra.mxu0 0.0
        %1747 = vmatprep.subr.mxu0 0.0
        %1748 = vmatpush1.msra.mxu0 %v1530
        %1749 = vmatprep.subr.mxu0 0.0
        %1750 = vmatpush1.msra.mxu0 %v1529
        %1751 = vmatprep.subr.mxu0 0.0
        %1752 = vmatpush1.msra.mxu0 %v1528
        %1753 = vmatprep.subr.mxu0 0.0
        %1754 = vmatpush1.msra.mxu0 %v1527
        %1755 = vmatprep.subr.mxu0 0.0
        %1756 = vmatpush1.msra.mxu0 %v1526
        %1757 = vmatprep.subr.mxu0 0.0
        %1758 = vmatpush1.msra.mxu0 %v1525
        %1759 = vmatprep.subr.mxu0 0.0
        %1760 = vmatpush1.msra.mxu0 %v1524
        %1761 = vmatprep.subr.mxu0 0.0
        %1762 = vmatpush1.msra.mxu0 %v1523
        %1763 = vmatprep.subr.mxu0 0.0
        %1764 = vmatpush2.msra.mxu0 0.0
        %1765 = vmatprep.subr.mxu0 0.0
        %1766 = vmatpush2.msra.mxu0 0.0
        %1767 = vmatprep.subr.mxu0 0.0
        %1768 = vmatpush2.msra.mxu0 0.0
        %1769 = vmatprep.subr.mxu0 0.0
        %1770 = vmatpush2.msra.mxu0 0.0
        %1771 = vmatprep.subr.mxu0 0.0
        %1772 = vmatpush2.msra.mxu0 0.0
        %1773 = vmatprep.subr.mxu0 0.0
        %1774 = vmatpush2.msra.mxu0 0.0
        %1775 = vmatprep.subr.mxu0 0.0
        %1776 = vmatpush2.msra.mxu0 0.0
        %1777 = vmatprep.subr.mxu0 0.0
        %1778 = vmatpush2.msra.mxu0 0.0
        %1779 = vmatprep.subr.mxu0 0.0
        %1780 = vmatpush2.msra.mxu0 0.0
        %1781 = vmatprep.subr.mxu0 0.0
        %1782 = vmatpush2.msra.mxu0 0.0
        %1783 = vmatprep.subr.mxu0 0.0
        %1784 = vmatpush2.msra.mxu0 0.0
        %1785 = vmatprep.subr.mxu0 0.0
        %1786 = vmatpush2.msra.mxu0 0.0
        %1787 = vmatprep.subr.mxu0 0.0
        %1788 = vmatpush2.msra.mxu0 0.0
        %1789 = vmatprep.subr.mxu0 0.0
        %1790 = vmatpush2.msra.mxu0 0.0
        %1791 = vmatprep.subr.mxu0 0.0
        %1792 = vmatpush2.msra.mxu0 0.0
        %1793 = vmatprep.subr.mxu0 0.0
        %1794 = vmatpush2.msra.mxu0 0.0
        %1795 = vmatprep.mubr.f32.mxu0 0.0
        %1796 = vmatmul.mubr.f32.gmra.mxu0 %v1540
        %v1797 = vpop.f32.mrf.mxu0
        %v1798 = vadd.f32 %v1536, %v1797
        %v1799 = vpop.f32.mrf.mxu0
        %1800 = vmatprep.mubr.f32.mxu0 0.0
        %1801 = vmatmul.mubr.f32.gmra.mxu0 %v1543
        %v1802 = vpop.f32.mrf.mxu0
        %v1803 = vadd.f32 %v1536, %v1802
        %v1804 = vpop.f32.mrf.mxu0
        %1805 = vmatprep.mubr.f32.mxu0 0.0
        %1806 = vmatmul.mubr.f32.gmra.mxu0 %v1546
        %v1807 = vpop.f32.mrf.mxu0
        %v1808 = vadd.f32 %v1536, %v1807
        %v1809 = vpop.f32.mrf.mxu0
        %1810 = vmatprep.mubr.f32.mxu0 0.0
        %1811 = vmatmul.mubr.f32.gmra.mxu0 %v1549
        %v1812 = vpop.f32.mrf.mxu0
        %v1813 = vadd.f32 %v1536, %v1812
        %v1814 = vpop.f32.mrf.mxu0
        %1815 = vmatprep.mubr.f32.mxu0 0.0
        %1816 = vmatmul.mubr.f32.gmra.mxu0 %v1552
        %v1817 = vpop.f32.mrf.mxu0
        %v1818 = vadd.f32 %v1536, %v1817
        %v1819 = vpop.f32.mrf.mxu0
        %1820 = vmatprep.mubr.f32.mxu0 0.0
        %1821 = vmatmul.mubr.f32.gmra.mxu0 %v1555
        %v1822 = vpop.f32.mrf.mxu0
        %v1823 = vadd.f32 %v1536, %v1822
        %v1824 = vpop.f32.mrf.mxu0
        %1825 = vmatprep.mubr.f32.mxu0 0.0
        %1826 = vmatmul.mubr.f32.gmra.mxu0 %v1558
        %v1827 = vpop.f32.mrf.mxu0
        %v1828 = vadd.f32 %v1536, %v1827
        %v1829 = vpop.f32.mrf.mxu0
        %1830 = vmatprep.mubr.f32.mxu0 0.0
        %1831 = vmatmul.mubr.f32.gmra.mxu0 %v1561
        %v1832 = vpop.f32.mrf.mxu0
        %v1833 = vadd.f32 %v1536, %v1832
        %v1834 = vpop.f32.mrf.mxu0
        %1835 = vmatprep.mubr.f32.mxu0 0.0
        %1836 = vmatmul.mubr.f32.gmra.mxu0 %v1564
        %v1837 = vpop.f32.mrf.mxu0
        %v1838 = vadd.f32 %v1536, %v1837
        %v1839 = vpop.f32.mrf.mxu0
        %1840 = vmatprep.mubr.f32.mxu0 0.0
        %1841 = vmatmul.mubr.f32.gmra.mxu0 %v1567
        %v1842 = vpop.f32.mrf.mxu0
        %v1843 = vadd.f32 %v1536, %v1842
        %v1844 = vpop.f32.mrf.mxu0
        %1845 = vmatprep.mubr.f32.mxu0 0.0
        %1846 = vmatmul.mubr.f32.gmra.mxu0 %v1570
        %v1847 = vpop.f32.mrf.mxu0
        %v1848 = vadd.f32 %v1536, %v1847
        %v1849 = vpop.f32.mrf.mxu0
        %1850 = vmatprep.mubr.f32.mxu0 0.0
        %1851 = vmatmul.mubr.f32.gmra.mxu0 %v1573
        %v1852 = vpop.f32.mrf.mxu0
        %v1853 = vadd.f32 %v1536, %v1852
        %v1854 = vpop.f32.mrf.mxu0
        %1855 = vmatprep.mubr.f32.mxu0 0.0
        %1856 = vmatmul.mubr.f32.gmra.mxu0 %v1576
        %v1857 = vpop.f32.mrf.mxu0
        %v1858 = vadd.f32 %v1536, %v1857
        %v1859 = vpop.f32.mrf.mxu0
        %1860 = vmatprep.mubr.f32.mxu0 0.0
        %1861 = vmatmul.mubr.f32.gmra.mxu0 %v1579
        %v1862 = vpop.f32.mrf.mxu0
        %v1863 = vadd.f32 %v1536, %v1862
        %v1864 = vpop.f32.mrf.mxu0
        %1865 = vmatprep.mubr.f32.mxu0 0.0
        %1866 = vmatmul.mubr.f32.gmra.mxu0 %v1582
        %v1867 = vpop.f32.mrf.mxu0
        %v1868 = vadd.f32 %v1536, %v1867
        %v1869 = vpop.f32.mrf.mxu0
        %1870 = vmatprep.mubr.f32.mxu0 0.0
        %1871 = vmatmul.mubr.f32.gmra.mxu0 %v1585
        %v1872 = vpop.f32.mrf.mxu0
        %v1873 = vadd.f32 %v1536, %v1872
        %v1874 = vpop.f32.mrf.mxu0
        %1875 = vmatprep.mubr.f32.mxu0 0.0
        %1876 = vmatmul.mubr.f32.gmra.mxu0 %v1588
        %v1877 = vpop.f32.mrf.mxu0
        %v1878 = vadd.f32 %v1536, %v1877
        %v1879 = vpop.f32.mrf.mxu0
        %1880 = vmatprep.mubr.f32.mxu0 0.0
        %1881 = vmatmul.mubr.f32.gmra.mxu0 %v1591
        %v1882 = vpop.f32.mrf.mxu0
        %v1883 = vadd.f32 %v1536, %v1882
        %v1884 = vpop.f32.mrf.mxu0
        %1885 = vmatprep.mubr.f32.mxu0 0.0
        %1886 = vmatmul.mubr.f32.gmra.mxu0 %v1594
        %v1887 = vpop.f32.mrf.mxu0
        %v1888 = vadd.f32 %v1536, %v1887
        %v1889 = vpop.f32.mrf.mxu0
        %1890 = vmatprep.mubr.f32.mxu0 0.0
        %1891 = vmatmul.mubr.f32.gmra.mxu0 %v1597
        %v1892 = vpop.f32.mrf.mxu0
        %v1893 = vadd.f32 %v1536, %v1892
        %v1894 = vpop.f32.mrf.mxu0
        %1895 = vmatprep.mubr.f32.mxu0 0.0
        %1896 = vmatmul.mubr.f32.gmra.mxu0 %v1600
        %v1897 = vpop.f32.mrf.mxu0
        %v1898 = vadd.f32 %v1536, %v1897
        %v1899 = vpop.f32.mrf.mxu0
        %1900 = vmatprep.mubr.f32.mxu0 0.0
        %1901 = vmatmul.mubr.f32.gmra.mxu0 %v1603
        %v1902 = vpop.f32.mrf.mxu0
        %v1903 = vadd.f32 %v1536, %v1902
        %v1904 = vpop.f32.mrf.mxu0
        %1905 = vmatprep.mubr.f32.mxu0 0.0
        %1906 = vmatmul.mubr.f32.gmra.mxu0 %v1606
        %v1907 = vpop.f32.mrf.mxu0
        %v1908 = vadd.f32 %v1536, %v1907
        %v1909 = vpop.f32.mrf.mxu0
        %1910 = vmatprep.mubr.f32.mxu0 0.0
        %1911 = vmatmul.mubr.f32.gmra.mxu0 %v1609
        %v1912 = vpop.f32.mrf.mxu0
        %v1913 = vadd.f32 %v1536, %v1912
        %v1914 = vpop.f32.mrf.mxu0
        %1915 = vmatprep.mubr.f32.mxu0 0.0
        %1916 = vmatmul.mubr.f32.gmra.mxu0 %v1612
        %v1917 = vpop.f32.mrf.mxu0
        %v1918 = vadd.f32 %v1536, %v1917
        %v1919 = vpop.f32.mrf.mxu0
        %1920 = vmatprep.mubr.f32.mxu0 0.0
        %1921 = vmatmul.mubr.f32.gmra.mxu0 %v1615
        %v1922 = vpop.f32.mrf.mxu0
        %v1923 = vadd.f32 %v1536, %v1922
        %v1924 = vpop.f32.mrf.mxu0
        %1925 = vmatprep.mubr.f32.mxu0 0.0
        %1926 = vmatmul.mubr.f32.gmra.mxu0 %v1618
        %v1927 = vpop.f32.mrf.mxu0
        %v1928 = vadd.f32 %v1536, %v1927
        %v1929 = vpop.f32.mrf.mxu0
        %1930 = vmatprep.mubr.f32.mxu0 0.0
        %1931 = vmatmul.mubr.f32.gmra.mxu0 %v1621
        %v1932 = vpop.f32.mrf.mxu0
        %v1933 = vadd.f32 %v1536, %v1932
        %v1934 = vpop.f32.mrf.mxu0
        %1935 = vmatprep.mubr.f32.mxu0 0.0
        %1936 = vmatmul.mubr.f32.gmra.mxu0 %v1624
        %v1937 = vpop.f32.mrf.mxu0
        %v1938 = vadd.f32 %v1536, %v1937
        %v1939 = vpop.f32.mrf.mxu0
        %1940 = vmatprep.mubr.f32.mxu0 0.0
        %1941 = vmatmul.mubr.f32.gmra.mxu0 %v1627
        %v1942 = vpop.f32.mrf.mxu0
        %v1943 = vadd.f32 %v1536, %v1942
        %v1944 = vpop.f32.mrf.mxu0
        %1945 = vmatprep.mubr.f32.mxu0 0.0
        %1946 = vmatmul.mubr.f32.gmra.mxu0 %v1630
        %v1947 = vpop.f32.mrf.mxu0
        %v1948 = vadd.f32 %v1536, %v1947
        %v1949 = vpop.f32.mrf.mxu0
        %1950 = vmatprep.mubr.f32.mxu0 0.0
        %1951 = vmatmul.mubr.f32.gmra.mxu0 %v1633
        %v1952 = vpop.f32.mrf.mxu0
        %v1953 = vadd.f32 %v1536, %v1952
        %v1954 = vpop.f32.mrf.mxu0
        %1955 = vmatprep.mubr.f32.mxu0 0.0
        %1956 = vmatmul.mubr.f32.gmra.mxu0 %v1636
        %v1957 = vpop.f32.mrf.mxu0
        %v1958 = vadd.f32 %v1536, %v1957
        %v1959 = vpop.f32.mrf.mxu0
        %1960 = vmatprep.mubr.f32.mxu0 0.0
        %1961 = vmatmul.mubr.f32.gmra.mxu0 %v1639
        %v1962 = vpop.f32.mrf.mxu0
        %v1963 = vadd.f32 %v1536, %v1962
        %v1964 = vpop.f32.mrf.mxu0
        %1965 = vmatprep.mubr.f32.mxu0 0.0
        %1966 = vmatmul.mubr.f32.gmra.mxu0 %v1642
        %v1967 = vpop.f32.mrf.mxu0
        %v1968 = vadd.f32 %v1536, %v1967
        %v1969 = vpop.f32.mrf.mxu0
        %1970 = vmatprep.mubr.f32.mxu0 0.0
        %1971 = vmatmul.mubr.f32.gmra.mxu0 %v1645
        %v1972 = vpop.f32.mrf.mxu0
        %v1973 = vadd.f32 %v1536, %v1972
        %v1974 = vpop.f32.mrf.mxu0
        %1975 = vmatprep.mubr.f32.mxu0 0.0
        %1976 = vmatmul.mubr.f32.gmra.mxu0 %v1648
        %v1977 = vpop.f32.mrf.mxu0
        %v1978 = vadd.f32 %v1536, %v1977
        %v1979 = vpop.f32.mrf.mxu0
        %1980 = vmatprep.mubr.f32.mxu0 0.0
        %1981 = vmatmul.mubr.f32.gmra.mxu0 %v1651
        %v1982 = vpop.f32.mrf.mxu0
        %v1983 = vadd.f32 %v1536, %v1982
        %v1984 = vpop.f32.mrf.mxu0
        %1985 = vmatprep.mubr.f32.mxu0 0.0
        %1986 = vmatmul.mubr.f32.gmra.mxu0 %v1654
        %v1987 = vpop.f32.mrf.mxu0
        %v1988 = vadd.f32 %v1536, %v1987
        %v1989 = vpop.f32.mrf.mxu0
        %1990 = vmatprep.mubr.f32.mxu0 0.0
        %1991 = vmatmul.mubr.f32.gmra.mxu0 %v1657
        %v1992 = vpop.f32.mrf.mxu0
        %v1993 = vadd.f32 %v1536, %v1992
        %v1994 = vpop.f32.mrf.mxu0
        %1995 = vmatprep.mubr.f32.mxu0 0.0
        %1996 = vmatmul.mubr.f32.gmra.mxu0 %v1660
        %v1997 = vpop.f32.mrf.mxu0
        %v1998 = vadd.f32 %v1536, %v1997
        %v1999 = vpop.f32.mrf.mxu0
        %2000 = vmatprep.mubr.f32.mxu0 0.0
        %2001 = vmatmul.mubr.f32.gmra.mxu0 %v1663
        %v2002 = vpop.f32.mrf.mxu0
        %v2003 = vadd.f32 %v1536, %v2002
        %v2004 = vpop.f32.mrf.mxu0
        %2005 = vmatprep.mubr.f32.mxu0 0.0
        %2006 = vmatmul.mubr.f32.gmra.mxu0 %v1666
        %v2007 = vpop.f32.mrf.mxu0
        %v2008 = vadd.f32 %v1536, %v2007
        %v2009 = vpop.f32.mrf.mxu0
        %2010 = vmatprep.mubr.f32.mxu0 0.0
        %2011 = vmatmul.mubr.f32.gmra.mxu0 %v1669
        %v2012 = vpop.f32.mrf.mxu0
        %v2013 = vadd.f32 %v1536, %v2012
        %v2014 = vpop.f32.mrf.mxu0
        %2015 = vmatprep.mubr.f32.mxu0 0.0
        %2016 = vmatmul.mubr.f32.gmra.mxu0 %v1672
        %v2017 = vpop.f32.mrf.mxu0
        %v2018 = vadd.f32 %v1536, %v2017
        %v2019 = vpop.f32.mrf.mxu0
        %2020 = vmatprep.mubr.f32.mxu0 0.0
        %2021 = vmatmul.mubr.f32.gmra.mxu0 %v1675
        %v2022 = vpop.f32.mrf.mxu0
        %v2023 = vadd.f32 %v1536, %v2022
        %v2024 = vpop.f32.mrf.mxu0
        %2025 = vmatprep.mubr.f32.mxu0 0.0
        %2026 = vmatmul.mubr.f32.gmra.mxu0 %v1678
        %v2027 = vpop.f32.mrf.mxu0
        %v2028 = vadd.f32 %v1536, %v2027
        %v2029 = vpop.f32.mrf.mxu0
        %2030 = vmatprep.mubr.f32.mxu0 0.0
        %2031 = vmatmul.mubr.f32.gmra.mxu0 %v1681
        %v2032 = vpop.f32.mrf.mxu0
        %v2033 = vadd.f32 %v1536, %v2032
        %v2034 = vpop.f32.mrf.mxu0
        %2035 = vmatprep.mubr.f32.mxu0 0.0
        %2036 = vmatmul.mubr.f32.gmra.mxu0 %v1684
        %v2037 = vpop.f32.mrf.mxu0
        %v2038 = vadd.f32 %v1536, %v2037
        %v2039 = vpop.f32.mrf.mxu0
        %2040 = vmatprep.mubr.f32.mxu0 0.0
        %2041 = vmatmul.mubr.f32.gmra.mxu0 %v1687
        %v2042 = vpop.f32.mrf.mxu0
        %v2043 = vadd.f32 %v1536, %v2042
        %v2044 = vpop.f32.mrf.mxu0
        %2045 = vmatprep.mubr.f32.mxu0 0.0
        %2046 = vmatmul.mubr.f32.gmra.mxu0 %v1690
        %v2047 = vpop.f32.mrf.mxu0
        %v2048 = vadd.f32 %v1536, %v2047
        %v2049 = vpop.f32.mrf.mxu0
        %2050 = vmatprep.mubr.f32.mxu0 0.0
        %2051 = vmatmul.mubr.f32.gmra.mxu0 %v1693
        %v2052 = vpop.f32.mrf.mxu0
        %v2053 = vadd.f32 %v1536, %v2052
        %v2054 = vpop.f32.mrf.mxu0
        %2055 = vmatprep.mubr.f32.mxu0 0.0
        %2056 = vmatmul.mubr.f32.gmra.mxu0 %v1696
        %v2057 = vpop.f32.mrf.mxu0
        %v2058 = vadd.f32 %v1536, %v2057
        %v2059 = vpop.f32.mrf.mxu0
        %2060 = vmatprep.mubr.f32.mxu0 0.0
        %2061 = vmatmul.mubr.f32.gmra.mxu0 %v1699
        %v2062 = vpop.f32.mrf.mxu0
        %v2063 = vadd.f32 %v1536, %v2062
        %v2064 = vpop.f32.mrf.mxu0
        %2065 = vmatprep.mubr.f32.mxu0 0.0
        %2066 = vmatmul.mubr.f32.gmra.mxu0 %v1702
        %v2067 = vpop.f32.mrf.mxu0
        %v2068 = vadd.f32 %v1536, %v2067
        %v2069 = vpop.f32.mrf.mxu0
        %2070 = vmatprep.mubr.f32.mxu0 0.0
        %2071 = vmatmul.mubr.f32.gmra.mxu0 %v1705
        %v2072 = vpop.f32.mrf.mxu0
        %v2073 = vadd.f32 %v1536, %v2072
        %v2074 = vpop.f32.mrf.mxu0
        %2075 = vmatprep.mubr.f32.mxu0 0.0
        %2076 = vmatmul.mubr.f32.gmra.mxu0 %v1708
        %v2077 = vpop.f32.mrf.mxu0
        %v2078 = vadd.f32 %v1536, %v2077
        %v2079 = vpop.f32.mrf.mxu0
        %2080 = vmatprep.mubr.f32.mxu0 0.0
        %2081 = vmatmul.mubr.f32.gmra.mxu0 %v1711
        %v2082 = vpop.f32.mrf.mxu0
        %v2083 = vadd.f32 %v1536, %v2082
        %v2084 = vpop.f32.mrf.mxu0
        %2085 = vmatprep.mubr.f32.mxu0 0.0
        %2086 = vmatmul.mubr.f32.gmra.mxu0 %v1714
        %v2087 = vpop.f32.mrf.mxu0
        %v2088 = vadd.f32 %v1536, %v2087
        %v2089 = vpop.f32.mrf.mxu0
        %2090 = vmatprep.mubr.f32.mxu0 0.0
        %2091 = vmatmul.mubr.f32.gmra.mxu0 %v1717
        %v2092 = vpop.f32.mrf.mxu0
        %v2093 = vadd.f32 %v1536, %v2092
        %v2094 = vpop.f32.mrf.mxu0
        %2095 = vmatprep.mubr.f32.mxu0 0.0
        %2096 = vmatmul.mubr.f32.gmra.mxu0 %v1720
        %v2097 = vpop.f32.mrf.mxu0
        %v2098 = vadd.f32 %v1536, %v2097
        %v2099 = vpop.f32.mrf.mxu0
        %2100 = vmatprep.mubr.f32.mxu0 0.0
        %2101 = vmatmul.mubr.f32.gmra.mxu0 %v1723
        %v2102 = vpop.f32.mrf.mxu0
        %v2103 = vadd.f32 %v1536, %v2102
        %v2104 = vpop.f32.mrf.mxu0
        %2105 = vmatprep.mubr.f32.mxu0 0.0
        %2106 = vmatmul.mubr.f32.gmra.mxu0 %v1726
        %v2107 = vpop.f32.mrf.mxu0
        %v2108 = vadd.f32 %v1536, %v2107
        %v2109 = vpop.f32.mrf.mxu0
        %2110 = vmatprep.mubr.f32.mxu0 0.0
        %2111 = vmatmul.mubr.f32.gmra.mxu0 %v1729
        %v2112 = vpop.f32.mrf.mxu0
        %v2113 = vadd.f32 %v1536, %v2112
        %v2114 = vpop.f32.mrf.mxu0
        %2115 = vdwg.mxu0
        %v2116 = vmax.f32 %v1798, 0.0
        %v2117 = vmax.f32 %v1803, 0.0
        %v2118 = vmax.f32 %v1808, 0.0
        %v2119 = vmax.f32 %v1813, 0.0
        %v2120 = vmax.f32 %v1818, 0.0
        %v2121 = vmax.f32 %v1823, 0.0
        %v2122 = vmax.f32 %v1828, 0.0
        %v2123 = vmax.f32 %v1833, 0.0
        %v2124 = vmax.f32 %v1838, 0.0
        %v2125 = vmax.f32 %v1843, 0.0
        %v2126 = vmax.f32 %v1848, 0.0
        %v2127 = vmax.f32 %v1853, 0.0
        %v2128 = vmax.f32 %v1858, 0.0
        %v2129 = vmax.f32 %v1863, 0.0
        %v2130 = vmax.f32 %v1868, 0.0
        %v2131 = vmax.f32 %v1873, 0.0
        %v2132 = vmax.f32 %v1878, 0.0
        %v2133 = vmax.f32 %v1883, 0.0
        %v2134 = vmax.f32 %v1888, 0.0
        %v2135 = vmax.f32 %v1893, 0.0
        %v2136 = vmax.f32 %v1898, 0.0
        %v2137 = vmax.f32 %v1903, 0.0
        %v2138 = vmax.f32 %v1908, 0.0
        %v2139 = vmax.f32 %v1913, 0.0
        %v2140 = vmax.f32 %v1918, 0.0
        %v2141 = vmax.f32 %v1923, 0.0
        %v2142 = vmax.f32 %v1928, 0.0
        %v2143 = vmax.f32 %v1933, 0.0
        %v2144 = vmax.f32 %v1938, 0.0
        %v2145 = vmax.f32 %v1943, 0.0
        %v2146 = vmax.f32 %v1948, 0.0
        %v2147 = vmax.f32 %v1953, 0.0
        %v2148 = vmax.f32 %v1958, 0.0
        %v2149 = vmax.f32 %v1963, 0.0
        %v2150 = vmax.f32 %v1968, 0.0
        %v2151 = vmax.f32 %v1973, 0.0
        %v2152 = vmax.f32 %v1978, 0.0
        %v2153 = vmax.f32 %v1983, 0.0
        %v2154 = vmax.f32 %v1988, 0.0
        %v2155 = vmax.f32 %v1993, 0.0
        %v2156 = vmax.f32 %v1998, 0.0
        %v2157 = vmax.f32 %v2003, 0.0
        %v2158 = vmax.f32 %v2008, 0.0
        %v2159 = vmax.f32 %v2013, 0.0
        %v2160 = vmax.f32 %v2018, 0.0
        %v2161 = vmax.f32 %v2023, 0.0
        %v2162 = vmax.f32 %v2028, 0.0
        %v2163 = vmax.f32 %v2033, 0.0
        %v2164 = vmax.f32 %v2038, 0.0
        %v2165 = vmax.f32 %v2043, 0.0
        %v2166 = vmax.f32 %v2048, 0.0
        %v2167 = vmax.f32 %v2053, 0.0
        %v2168 = vmax.f32 %v2058, 0.0
        %v2169 = vmax.f32 %v2063, 0.0
        %v2170 = vmax.f32 %v2068, 0.0
        %v2171 = vmax.f32 %v2073, 0.0
        %v2172 = vmax.f32 %v2078, 0.0
        %v2173 = vmax.f32 %v2083, 0.0
        %v2174 = vmax.f32 %v2088, 0.0
        %v2175 = vmax.f32 %v2093, 0.0
        %v2176 = vmax.f32 %v2098, 0.0
        %v2177 = vmax.f32 %v2103, 0.0
        %v2178 = vmax.f32 %v2108, 0.0
        %v2179 = vmax.f32 %v2113, 0.0
        %v2180 = vld [vmem:[%s7] sm:$0x1]
        %v2181 = vld [vmem:[#allocation2] sm:$0x1]
        %2183 = vset.pattern.permute.xlu0 0
        %2184 = vperm.xlu0 %2183, %v2181
        %v2185 = vpop.permute.xlu0 %2184
        %v2187 = vlaneseq
        %v2188 = vshrl.u32 %v2187, 7
        %v2189 = vsub.s32 0, %v2188
        %v2190 = vrot.slane %v2185, %v2189
        %vm2191 = vcmask 261120
        %v2193 = vsel %vm2191, %v2180, 0
        %v2196 = vsel %vm2191, %v2116, 0
        %v2199 = vsel %vm2191, %v2117, 0
        %v2202 = vsel %vm2191, %v2118, 0
        %v2205 = vsel %vm2191, %v2119, 0
        %v2208 = vsel %vm2191, %v2120, 0
        %v2211 = vsel %vm2191, %v2121, 0
        %v2214 = vsel %vm2191, %v2122, 0
        %v2217 = vsel %vm2191, %v2123, 0
        %v2220 = vsel %vm2191, %v2124, 0
        %v2223 = vsel %vm2191, %v2125, 0
        %v2226 = vsel %vm2191, %v2126, 0
        %v2229 = vsel %vm2191, %v2127, 0
        %v2232 = vsel %vm2191, %v2128, 0
        %v2235 = vsel %vm2191, %v2129, 0
        %v2238 = vsel %vm2191, %v2130, 0
        %v2241 = vsel %vm2191, %v2131, 0
        %v2244 = vsel %vm2191, %v2132, 0
        %v2247 = vsel %vm2191, %v2133, 0
        %v2250 = vsel %vm2191, %v2134, 0
        %v2253 = vsel %vm2191, %v2135, 0
        %v2256 = vsel %vm2191, %v2136, 0
        %v2259 = vsel %vm2191, %v2137, 0
        %v2262 = vsel %vm2191, %v2138, 0
        %v2265 = vsel %vm2191, %v2139, 0
        %v2268 = vsel %vm2191, %v2140, 0
        %v2271 = vsel %vm2191, %v2141, 0
        %v2274 = vsel %vm2191, %v2142, 0
        %v2277 = vsel %vm2191, %v2143, 0
        %v2280 = vsel %vm2191, %v2144, 0
        %v2283 = vsel %vm2191, %v2145, 0
        %v2286 = vsel %vm2191, %v2146, 0
        %v2289 = vsel %vm2191, %v2147, 0
        %v2292 = vsel %vm2191, %v2148, 0
        %v2295 = vsel %vm2191, %v2149, 0
        %v2298 = vsel %vm2191, %v2150, 0
        %v2301 = vsel %vm2191, %v2151, 0
        %v2304 = vsel %vm2191, %v2152, 0
        %v2307 = vsel %vm2191, %v2153, 0
        %v2310 = vsel %vm2191, %v2154, 0
        %v2313 = vsel %vm2191, %v2155, 0
        %v2316 = vsel %vm2191, %v2156, 0
        %v2319 = vsel %vm2191, %v2157, 0
        %v2322 = vsel %vm2191, %v2158, 0
        %v2325 = vsel %vm2191, %v2159, 0
        %v2328 = vsel %vm2191, %v2160, 0
        %v2331 = vsel %vm2191, %v2161, 0
        %v2334 = vsel %vm2191, %v2162, 0
        %v2337 = vsel %vm2191, %v2163, 0
        %v2340 = vsel %vm2191, %v2164, 0
        %v2343 = vsel %vm2191, %v2165, 0
        %v2346 = vsel %vm2191, %v2166, 0
        %v2349 = vsel %vm2191, %v2167, 0
        %v2352 = vsel %vm2191, %v2168, 0
        %v2355 = vsel %vm2191, %v2169, 0
        %v2358 = vsel %vm2191, %v2170, 0
        %v2361 = vsel %vm2191, %v2171, 0
        %v2364 = vsel %vm2191, %v2172, 0
        %v2367 = vsel %vm2191, %v2173, 0
        %v2370 = vsel %vm2191, %v2174, 0
        %v2373 = vsel %vm2191, %v2175, 0
        %v2376 = vsel %vm2191, %v2176, 0
        %v2379 = vsel %vm2191, %v2177, 0
        %v2382 = vsel %vm2191, %v2178, 0
        %v2385 = vsel %vm2191, %v2179, 0
        %2387 = vmatprep.subr.mxu0 0.0
        %2388 = vmatpush1.xpose.msra.mxu0 %v2241
        %2389 = vmatprep.subr.mxu0 0.0
        %2390 = vmatpush1.xpose.msra.mxu0 %v2238
        %2391 = vmatprep.subr.mxu0 0.0
        %2392 = vmatpush1.xpose.msra.mxu0 %v2235
        %2393 = vmatprep.subr.mxu0 0.0
        %2394 = vmatpush1.xpose.msra.mxu0 %v2232
        %2395 = vmatprep.subr.mxu0 0.0
        %2396 = vmatpush1.xpose.msra.mxu0 %v2229
        %2397 = vmatprep.subr.mxu0 0.0
        %2398 = vmatpush1.xpose.msra.mxu0 %v2226
        %2399 = vmatprep.subr.mxu0 0.0
        %2400 = vmatpush1.xpose.msra.mxu0 %v2223
        %2401 = vmatprep.subr.mxu0 0.0
        %2402 = vmatpush1.xpose.msra.mxu0 %v2220
        %2403 = vmatprep.subr.mxu0 0.0
        %2404 = vmatpush1.xpose.msra.mxu0 %v2217
        %2405 = vmatprep.subr.mxu0 0.0
        %2406 = vmatpush1.xpose.msra.mxu0 %v2214
        %2407 = vmatprep.subr.mxu0 0.0
        %2408 = vmatpush1.xpose.msra.mxu0 %v2211
        %2409 = vmatprep.subr.mxu0 0.0
        %2410 = vmatpush1.xpose.msra.mxu0 %v2208
        %2411 = vmatprep.subr.mxu0 0.0
        %2412 = vmatpush1.xpose.msra.mxu0 %v2205
        %2413 = vmatprep.subr.mxu0 0.0
        %2414 = vmatpush1.xpose.msra.mxu0 %v2202
        %2415 = vmatprep.subr.mxu0 0.0
        %2416 = vmatpush1.xpose.msra.mxu0 %v2199
        %2417 = vmatprep.subr.mxu0 0.0
        %2418 = vmatpush1.xpose.msra.mxu0 %v2196
        %2419 = vmatprep.subr.mxu0 0.0
        %2420 = vmatpush2.xpose.msra.mxu0 %v2289
        %2421 = vmatprep.subr.mxu0 0.0
        %2422 = vmatpush2.xpose.msra.mxu0 %v2286
        %2423 = vmatprep.subr.mxu0 0.0
        %2424 = vmatpush2.xpose.msra.mxu0 %v2283
        %2425 = vmatprep.subr.mxu0 0.0
        %2426 = vmatpush2.xpose.msra.mxu0 %v2280
        %2427 = vmatprep.subr.mxu0 0.0
        %2428 = vmatpush2.xpose.msra.mxu0 %v2277
        %2429 = vmatprep.subr.mxu0 0.0
        %2430 = vmatpush2.xpose.msra.mxu0 %v2274
        %2431 = vmatprep.subr.mxu0 0.0
        %2432 = vmatpush2.xpose.msra.mxu0 %v2271
        %2433 = vmatprep.subr.mxu0 0.0
        %2434 = vmatpush2.xpose.msra.mxu0 %v2268
        %2435 = vmatprep.subr.mxu0 0.0
        %2436 = vmatpush2.xpose.msra.mxu0 %v2265
        %2437 = vmatprep.subr.mxu0 0.0
        %2438 = vmatpush2.xpose.msra.mxu0 %v2262
        %2439 = vmatprep.subr.mxu0 0.0
        %2440 = vmatpush2.xpose.msra.mxu0 %v2259
        %2441 = vmatprep.subr.mxu0 0.0
        %2442 = vmatpush2.xpose.msra.mxu0 %v2256
        %2443 = vmatprep.subr.mxu0 0.0
        %2444 = vmatpush2.xpose.msra.mxu0 %v2253
        %2445 = vmatprep.subr.mxu0 0.0
        %2446 = vmatpush2.xpose.msra.mxu0 %v2250
        %2447 = vmatprep.subr.mxu0 0.0
        %2448 = vmatpush2.xpose.msra.mxu0 %v2247
        %2449 = vmatprep.subr.mxu0 0.0
        %2450 = vmatpush2.xpose.msra.mxu0 %v2244
        %2451 = vmatprep.mubr.f32.mxu0 0.0
        %2452 = vmatmul.mubr.f32.gmra.mxu0 %v2193
        %v2453 = vpop.f32.mrf.mxu0
        %v2454 = vadd.f32 %v2190, %v2453
        %v2455 = vpop.f32.mrf.mxu0
        %v2456 = vadd.f32 %v2190, %v2455
        %2457 = vdwg.mxu0
        %2458 = vmatprep.subr.mxu0 0.0
        %2459 = vmatpush1.xpose.msra.mxu0 %v2337
        %2460 = vmatprep.subr.mxu0 0.0
        %2461 = vmatpush1.xpose.msra.mxu0 %v2334
        %2462 = vmatprep.subr.mxu0 0.0
        %2463 = vmatpush1.xpose.msra.mxu0 %v2331
        %2464 = vmatprep.subr.mxu0 0.0
        %2465 = vmatpush1.xpose.msra.mxu0 %v2328
        %2466 = vmatprep.subr.mxu0 0.0
        %2467 = vmatpush1.xpose.msra.mxu0 %v2325
        %2468 = vmatprep.subr.mxu0 0.0
        %2469 = vmatpush1.xpose.msra.mxu0 %v2322
        %2470 = vmatprep.subr.mxu0 0.0
        %2471 = vmatpush1.xpose.msra.mxu0 %v2319
        %2472 = vmatprep.subr.mxu0 0.0
        %2473 = vmatpush1.xpose.msra.mxu0 %v2316
        %2474 = vmatprep.subr.mxu0 0.0
        %2475 = vmatpush1.xpose.msra.mxu0 %v2313
        %2476 = vmatprep.subr.mxu0 0.0
        %2477 = vmatpush1.xpose.msra.mxu0 %v2310
        %2478 = vmatprep.subr.mxu0 0.0
        %2479 = vmatpush1.xpose.msra.mxu0 %v2307
        %2480 = vmatprep.subr.mxu0 0.0
        %2481 = vmatpush1.xpose.msra.mxu0 %v2304
        %2482 = vmatprep.subr.mxu0 0.0
        %2483 = vmatpush1.xpose.msra.mxu0 %v2301
        %2484 = vmatprep.subr.mxu0 0.0
        %2485 = vmatpush1.xpose.msra.mxu0 %v2298
        %2486 = vmatprep.subr.mxu0 0.0
        %2487 = vmatpush1.xpose.msra.mxu0 %v2295
        %2488 = vmatprep.subr.mxu0 0.0
        %2489 = vmatpush1.xpose.msra.mxu0 %v2292
        %2490 = vmatprep.subr.mxu0 0.0
        %2491 = vmatpush2.xpose.msra.mxu0 %v2385
        %2492 = vmatprep.subr.mxu0 0.0
        %2493 = vmatpush2.xpose.msra.mxu0 %v2382
        %2494 = vmatprep.subr.mxu0 0.0
        %2495 = vmatpush2.xpose.msra.mxu0 %v2379
        %2496 = vmatprep.subr.mxu0 0.0
        %2497 = vmatpush2.xpose.msra.mxu0 %v2376
        %2498 = vmatprep.subr.mxu0 0.0
        %2499 = vmatpush2.xpose.msra.mxu0 %v2373
        %2500 = vmatprep.subr.mxu0 0.0
        %2501 = vmatpush2.xpose.msra.mxu0 %v2370
        %2502 = vmatprep.subr.mxu0 0.0
        %2503 = vmatpush2.xpose.msra.mxu0 %v2367
        %2504 = vmatprep.subr.mxu0 0.0
        %2505 = vmatpush2.xpose.msra.mxu0 %v2364
        %2506 = vmatprep.subr.mxu0 0.0
        %2507 = vmatpush2.xpose.msra.mxu0 %v2361
        %2508 = vmatprep.subr.mxu0 0.0
        %2509 = vmatpush2.xpose.msra.mxu0 %v2358
        %2510 = vmatprep.subr.mxu0 0.0
        %2511 = vmatpush2.xpose.msra.mxu0 %v2355
        %2512 = vmatprep.subr.mxu0 0.0
        %2513 = vmatpush2.xpose.msra.mxu0 %v2352
        %2514 = vmatprep.subr.mxu0 0.0
        %2515 = vmatpush2.xpose.msra.mxu0 %v2349
        %2516 = vmatprep.subr.mxu0 0.0
        %2517 = vmatpush2.xpose.msra.mxu0 %v2346
        %2518 = vmatprep.subr.mxu0 0.0
        %2519 = vmatpush2.xpose.msra.mxu0 %v2343
        %2520 = vmatprep.subr.mxu0 0.0
        %2521 = vmatpush2.xpose.msra.mxu0 %v2340
        %2522 = vmatprep.mubr.f32.mxu0 0.0
        %2523 = vmatmul.mubr.f32.gmra.mxu0 %v2193
        %v2524 = vpop.f32.mrf.mxu0
        %v2525 = vadd.f32 %v2190, %v2524
        %v2526 = vpop.f32.mrf.mxu0
        %v2527 = vadd.f32 %v2190, %v2526
        %2528 = vdwg.mxu0
        %v2529 = vsub.f32 0.0, %v2454
        %v2530 = vsub.f32 0.0, %v2456
        %v2531 = vsub.f32 0.0, %v2525
        %v2532 = vsub.f32 0.0, %v2527
        %v2533 = vmul.f32 %v2529, 1.442695
        %v2534 = vpow.pop %v2533
        %v2535 = vmul.f32 %v2530, 1.442695
        %v2536 = vpow.pop %v2535
        %v2537 = vmul.f32 %v2531, 1.442695
        %v2538 = vpow.pop %v2537
        %v2539 = vmul.f32 %v2532, 1.442695
        %v2540 = vpow.pop %v2539
        %v2541 = vadd.f32 %v2534, 1.0
        %v2542 = vadd.f32 %v2536, 1.0
        %v2543 = vadd.f32 %v2538, 1.0
        %v2544 = vadd.f32 %v2540, 1.0
        %v2545 = vrcp.pop %v2541
        %v2546 = vrcp.pop %v2542
        %v2547 = vrcp.pop %v2543
        %v2548 = vrcp.pop %v2544
        %v2553 = vcombine.low %v2545, %v2546
        %v2554 = vcombine.low %v2547, %v2548
        %v2556 = vunpack.c.l.s4 1966171168
        %v2557 = vunpack.c.0.s8 %v2556
        %v2558 = vlaneseq
        %v2559 = vshrl.u32 %v2558, 7
        %v2560 = vsub.s32 %v2557, %v2559
        %v2561 = vrot.slane %v2553, %v2560
        %v2563 = vunpack.c.l.s4 1966171168
        %v2564 = vunpack.c.0.s8 %v2563
        %v2565 = vlaneseq
        %v2566 = vshrl.u32 %v2565, 7
        %v2567 = vsub.s32 %v2564, %v2566
        %v2568 = vrot.slane %v2554, %v2567
        %v2569 = vcombine.low %v2561, %v2568
        %v2571 = vunpack.c.l.s4 1966171168
        %v2572 = vunpack.c.0.s8 %v2571
        %v2573 = vlaneseq
        %v2574 = vshrl.u32 %v2573, 7
        %v2575 = vsub.s32 %v2572, %v2574
        %v2576 = vrot.slane %v2569, %v2575
        %v2578 = vlaneseq
        %vm2579 = vcmp.ge.s32.totalorder %v2578, 0
        %vm2580 = vcmp.lt.s32.totalorder %v2578, 512
        %vm2581 = vmand %vm2579, %vm2580
        %2582 = vst.msk [vmem:[%s328] sm:$0xf] %vm2581, %v2576
        %s2583 = sand.u32 %s227, 1
        %s2584 = scalar_lea.sflag [#allocation4], %s2583
        %s2585 = sand.u32 %s227, 1
        %s2586 = smul.addr %s2585, 4
        %s2587 = scalar_lea.vmem [#allocation3], %s2586
        // Predicated region
        $region57: #{tpu_custom_call.1} parent=55 // pred_check
          %p2588 = pneg %p237
        $region58: #{tpu_custom_call.1} parent=55 // pred_check_branch
          %2590 = sbr.rel (%p2588) target = $region60
        $region59: #{tpu_custom_call.1} parent=55 // pred_region
          %s2591 = smul.u32 4, %s25
          %s2593 = ssub.s32 64, 64
          %2594 = vsyncadd %s2584, %s2593
          %s2595 = smul.addr %s2591, 16
          %s2596 = scalar_lea.hbm %s9, %s2595
          %s2598 = sshll.u32 %s2587, 4
          %s2599 = int_to_ptr.vmem [resolvable:$true] %s2598
          %2601 = dma.vmem_to_hbm [thread:$0]  %s2599, 64, %s2596, %s2584
        $region60: #{tpu_custom_call.1} parent=55 // pred_fallthru
          _
      $region56: #{tpu_custom_call.1} parent=5 // pred_fallthru
        _
      %p2602 = scmp.le.s32.totalorder 2, %s20
      // Predicated region
      $region61: #{tpu_custom_call.1} parent=5 // pred_check
        %p2603 = pneg %p2602
      $region62: #{tpu_custom_call.1} parent=5 // pred_check_branch
        %2605 = sbr.rel (%p2603) target = $region64
      $region63: #{tpu_custom_call.1} parent=5 // pred_region
        %s2606 = ssub.s32 %s20, 2
        // Predicated region
        $region65: #{tpu_custom_call.1} parent=63 // pred_check
          %p2607 = pneg %p243
        $region66: #{tpu_custom_call.1} parent=63 // pred_check_branch
          %2609 = sbr.rel (%p2607) target = $region68
        $region67: #{tpu_custom_call.1} parent=63 // pred_region
          %s2610 = sand.u32 %s228, 1
          %s2611 = scalar_lea.sflag [#allocation4], %s2610
          %s2612 = sand.u32 %s228, 1
          %s2613 = smul.addr %s2612, 4
          %s2614 = scalar_lea.vmem [#allocation3], %s2613
          %2615 = dma.done %s2611, 64
        $region68: #{tpu_custom_call.1} parent=63 // pred_fallthru
          _
      $region64: #{tpu_custom_call.1} parent=5 // pred_fallthru
        _
    $region6: #{tpu_custom_call.1} parent=1 // loop_footer
      %s24 = sadd.s32 1, %s20
    $region7: #{tpu_custom_call.1} parent=1 // loop_footer_branch
      %19 = sbr.rel target = $region3
    $region8: #{tpu_custom_call.1} parent=1 // loop_exit
      _
    %2616 = vsyncpa [#allocation4], 1
    %s2617 = scalar_lea.sflag [#allocation4], 1
    %2618 = vsyncpa %s2617, 1

</llo_original>
